<compile_context>
chip_gen: v5e
topology: v5e:2x2
jax: 0.10.0
libtpu: 0.0.40
codegen_flags: <defaults>
</compile_context>

<pallas_src>
import functools

import jax
import jax.numpy as jnp
import numpy as np
from jax.experimental import pallas as pl
from jax.experimental.pallas import tpu as pltpu


# ----------------------------------------------------------------------------
# In-kernel helpers: log-step (Hillis-Steele) scans along axis 0 of a 2-D array.
# The shift uses pltpu.roll (XLU rotate) + an iota mask instead of concatenate,
# so the DP wavefront burns no vld/vst slots on fresh VMEM temps.
# ----------------------------------------------------------------------------
def _shift_down_rows(x, sh, fill):
    rolled = pltpu.roll(x, shift=sh, axis=0)            # rows move toward higher indices
    keep = jax.lax.broadcasted_iota(jnp.int32, x.shape, 0) >= sh
    return jnp.where(keep, rolled, fill)


def _cumsum_rows(x):
    sh = 1
    while sh < x.shape[0]:
        x = x + _shift_down_rows(x, sh, 0.0)
        sh *= 2
    return x


def _cummin_rows(x, big):
    sh = 1
    while sh < x.shape[0]:
        x = jnp.minimum(x, _shift_down_rows(x, sh, big))
        sh *= 2
    return x


# ----------------------------------------------------------------------------
# Fused kernel: one anchor-column block of T anchors per grid step.
#   global dist + hard mining + one-hot gather + batch_local_dist (pos & neg
#   stacked into a 2T lane batch) + per-block MarginRankingLoss partial sums.
# ----------------------------------------------------------------------------
def fused_triplet_kernel(lab_col_ref, lab_row_ref, x_ref, xb_ref, lf_ref, lfb_ref,
                         gl_ref, ll_ref, *, margin, num_parts, use_bf16_mxu):
    n = x_ref.shape[0]
    t = xb_ref.shape[0]
    m = num_parts
    c = lf_ref.shape[0] // m
    big = jnp.float32(1e30)

    gram_dt = jnp.bfloat16 if use_bf16_mxu else x_ref.dtype
    gath_dt = jnp.bfloat16 if use_bf16_mxu else lf_ref.dtype

    # ---- global pairwise distances: all N candidates (rows) vs T block anchors (cols) ----
    xf = x_ref[...].astype(jnp.float32)                                  # (N, D)
    xbf = xb_ref[...].astype(jnp.float32)                                # (T, D)
    sq_col = jnp.sum(xf * xf, axis=1, keepdims=True)                     # (N, 1), f32
    sq_row = jax.lax.dot_general(                                        # (1, T) anchor ||x||^2
        jnp.ones((1, xbf.shape[1]), jnp.float32), xbf * xbf,
        (((1,), (1,)), ((), ())), preferred_element_type=jnp.float32)
    gram = jax.lax.dot_general(                                          # (N, T) MXU
        x_ref[...].astype(gram_dt), xb_ref[...].astype(gram_dt),
        (((1,), (1,)), ((), ())), preferred_element_type=jnp.float32)
    dist = jnp.sqrt(jnp.maximum(sq_col + sq_row - 2.0 * gram, 1e-12))    # (N, T), f32

    # ---- hard example mining along axis 0 (dist symmetric => identical to per-row mining)
    is_pos = lab_col_ref[...] == lab_row_ref[...]                        # (N, T)
    dpos = jnp.where(is_pos, dist, -big)
    dneg = jnp.where(is_pos, big, dist)
    dist_ap = jnp.max(dpos, axis=0, keepdims=True)                       # (1, T)
    dist_an = jnp.min(dneg, axis=0, keepdims=True)                       # (1, T)

    row_f = jax.lax.broadcasted_iota(jnp.int32, (n, t), 0).astype(jnp.float32)
    n_f = jnp.float32(n)
    p_idx = jnp.min(jnp.where(dpos == dist_ap, row_f, n_f), axis=0, keepdims=True)  # (1, T)
    n_idx = jnp.min(jnp.where(dneg == dist_an, row_f, n_f), axis=0, keepdims=True)  # (1, T)

    # ---- gather hard positive / negative local features via one-hot MXU matmul -----------
    idx_row = jnp.concatenate([p_idx, n_idx], axis=1)                    # (1, 2T)
    siota = jax.lax.broadcasted_iota(jnp.int32, (n, 2 * t), 0).astype(jnp.float32)
    sel = (siota == idx_row).astype(gath_dt)                             # (N, 2T) one-hot cols
    y = jax.lax.dot_general(lf_ref[...].astype(gath_dt), sel,            # (M*C, 2T) gathered
                            (((1,), (0,)), ((), ())),
                            preferred_element_type=jnp.float32)

    # ---- per-part slabs, anchors on the lane axis -----------------------------------------
    xb_lf = lfb_ref[...].astype(jnp.float32)                             # (M*C, T) anchor feats
    xd = jnp.concatenate([xb_lf, xb_lf], axis=1)                         # (M*C, 2T)
    y3 = jnp.concatenate([y[i * c:(i + 1) * c, :][None] for i in range(m)], axis=0)  # (M,C,2T)
    yy = jnp.sum(y3 * y3, axis=1)                                        # (M, 2T)
    xx = jnp.concatenate(
        [jnp.sum(xb_lf[i * c:(i + 1) * c, :] * xb_lf[i * c:(i + 1) * c, :],
                 axis=0, keepdims=True) for i in range(m)], axis=0)      # (M, T)  (half work)
    xxd = jnp.concatenate([xx, xx], axis=1)                              # (M, 2T)

    # ---- batch_local_dist: tanh-normalized part distances + min-plus DP wavefront --------
    # dp[j, :] = shortest path cost to cell (i, j) for every anchor (lane axis = 2T).
    ridx = jax.lax.broadcasted_iota(jnp.int32, (m, 2 * t), 0)
    dp = jnp.where(ridx == 0, jnp.float32(0.0), big)                     # virtual row "-1"
    for i in range(m):
        x_i = xd[i * c:(i + 1) * c, :]                                   # (C, 2T)
        prod = jnp.sum(x_i[None, :, :] * y3, axis=1)                     # (M, 2T): <x_i, y_j>
        d2 = xxd[i:i + 1, :] + yy - 2.0 * prod
        ci = jnp.tanh(0.5 * jnp.sqrt(jnp.maximum(d2, 1e-12)))            # == (e^d-1)/(e^d+1)
        s = _cumsum_rows(ci)                                             # inclusive cumsum over j
        u = dp - s + ci                                                  # dp_prev[j] - S[j-1]
        dp = s + _cummin_rows(u, big)                                    # min-plus wavefront
    last = dp[m - 1:m, :]                                                # (1, 2T)
    local_ap = last[:, :t]                                               # (1, T)
    local_an = last[:, t:]                                               # (1, T)

    # ---- MarginRankingLoss (y = +1) partial sums for this anchor block --------------------
    g = jnp.maximum(dist_ap - dist_an + margin, 0.0)                     # (1, T)
    lcl = jnp.maximum(local_ap - local_an + margin, 0.0)                 # (1, T)
    gl_ref[...] = jnp.sum(g, axis=1, keepdims=True).reshape(1, 1, 1)
    ll_ref[...] = jnp.sum(lcl, axis=1, keepdims=True).reshape(1, 1, 1)


# ----------------------------------------------------------------------------
# Wrapper
# ----------------------------------------------------------------------------
def triplet_aligned_reid_loss(inputs, targets, local_features, margin=0.3,
                              force_bf16_mxu=False):
    """Forward of TripletAlignedReIDloss (mutual_flag=False). Returns (global_loss, local_loss)."""
    n, d = inputs.shape
    _, c, m = local_features.shape
    lab = targets.astype(jnp.int32)
    lab_row = lab.reshape(1, n)
    lab_col = lab.reshape(n, 1)
    # (N, C, M) -> (M, C, N) -> (M*C, N): parts-major rows, anchors on the lane axis.
    # Native dtype is kept (no f32 upcast): bf16 features halve the HBM->VMEM DMA and
    # feed the MXU directly.
    lf = jnp.transpose(local_features, (2, 1, 0)).reshape(m * c, n)

    # Anchor-column block: 128 when it divides N (production P*K batches), else one block.
    t = 128 if n % 128 == 0 else n
    nb = n // t

    kernel = functools.partial(fused_triplet_kernel, margin=float(margin),
                               num_parts=int(m), use_bf16_mxu=bool(force_bf16_mxu))

    cost = pl.CostEstimate(
        flops=int(2 * n * n * d + 4 * n * n * m * c + 4 * m * m * c * n),
        transcendentals=int(2 * m * m * n + n * n),
        bytes_accessed=int(inputs.size * inputs.dtype.itemsize
                           + local_features.size * local_features.dtype.itemsize
                           + 2 * n * 4 + 8 * nb))

    gl_p, ll_p = pl.pallas_call(
        kernel,
        out_shape=(jax.ShapeDtypeStruct((nb, 1, 1), jnp.float32),
                   jax.ShapeDtypeStruct((nb, 1, 1), jnp.float32)),
        grid=(nb,),
        in_specs=[
            pl.BlockSpec((n, 1), lambda j: (0, 0)),        # labels, candidate axis (resident)
            pl.BlockSpec((1, t), lambda j: (0, j)),        # labels of this anchor block
            pl.BlockSpec((n, d), lambda j: (0, 0)),        # all global features (resident)
            pl.BlockSpec((t, d), lambda j: (j, 0)),        # this block's global features
            pl.BlockSpec((m * c, n), lambda j: (0, 0)),    # all local features (resident)
            pl.BlockSpec((m * c, t), lambda j: (0, j)),    # this block's local features
        ],
        out_specs=(pl.BlockSpec((1, 1, 1), lambda j: (j, 0, 0)),
                   pl.BlockSpec((1, 1, 1), lambda j: (j, 0, 0))),
        compiler_params=pltpu.CompilerParams(
            dimension_semantics=("parallel",),             # megacore-shard anchor blocks (v7x)
            vmem_limit_bytes=32 * 1024 * 1024),            # v7x-safe (64 MiB physical) budget
        cost_estimate=cost,
    )(lab_col, lab_row, inputs, inputs, lf, lf)

    inv_n = jnp.float32(1.0 / n)
    return jnp.sum(gl_p) * inv_n, jnp.sum(ll_p) * inv_n


# ----------------------------------------------------------------------------
# Pure-JAX reference (mirrors the PyTorch semantics) for a correctness check
# ----------------------------------------------------------------------------
def _reference(inputs, targets, local_features, margin=0.3):
    hp = jax.lax.Precision.HIGHEST
    x = inputs.astype(jnp.float32)
    sq = jnp.sum(x * x, axis=1, keepdims=True)
    dist = jnp.sqrt(jnp.maximum(sq + sq.T - 2.0 * jnp.dot(x, x.T, precision=hp), 1e-12))
    is_pos = targets[:, None] == targets[None, :]
    dpos = jnp.where(is_pos, dist, -jnp.inf)
    dneg = jnp.where(is_pos, jnp.inf, dist)
    dist_ap = jnp.max(dpos, axis=1)
    dist_an = jnp.min(dneg, axis=1)
    p_inds = jnp.argmax(dpos, axis=1)
    n_inds = jnp.argmin(dneg, axis=1)

    lf = jnp.transpose(local_features, (0, 2, 1)).astype(jnp.float32)

    def bld(a, b):
        aa = jnp.sum(a * a, -1)[:, :, None]
        bb = jnp.sum(b * b, -1)[:, None, :]
        d = jnp.sqrt(jnp.maximum(
            aa + bb - 2.0 * jnp.einsum('nmd,nkd->nmk', a, b, precision=hp), 1e-12))
        d = (jnp.exp(d) - 1.0) / (jnp.exp(d) + 1.0)
        mm = d.shape[1]
        dp = [[None] * mm for _ in range(mm)]
        for i in range(mm):
            for j in range(mm):
                cc = d[:, i, j]
                if i == 0 and j == 0:
                    dp[i][j] = cc
                elif i == 0:
                    dp[i][j] = dp[i][j - 1] + cc
                elif j == 0:
                    dp[i][j] = dp[i - 1][j] + cc
                else:
                    dp[i][j] = jnp.minimum(dp[i - 1][j], dp[i][j - 1]) + cc
        return dp[-1][-1]

    lap = bld(lf, lf[p_inds])
    lan = bld(lf, lf[n_inds])
    gl = jnp.mean(jnp.maximum(dist_ap - dist_an + margin, 0.0))
    ll = jnp.mean(jnp.maximum(lap - lan + margin, 0.0))
    return gl, ll


if __name__ == "__main__":
    key = jax.random.PRNGKey(0)
    N, D, C, M = 8, 32, 16, 8           # batch, global feat dim, local channels, local parts
    k1, k2 = jax.random.split(key)
    inputs = jax.random.normal(k1, (N, D), jnp.float32)
    local_features = jax.random.normal(k2, (N, C, M), jnp.float32)
    targets = jnp.array([0, 0, 1, 1, 2, 2, 3, 3], jnp.int32)   # equal samples per class

    fn = jax.jit(triplet_aligned_reid_loss)

    # f32 path (exact vs reference)
    global_loss, local_loss = fn(inputs, targets, local_features)
    jax.block_until_ready((global_loss, local_loss))
    ref_gl, ref_ll = _reference(inputs, targets, local_features)
    np.testing.assert_allclose(np.asarray(global_loss), np.asarray(ref_gl), rtol=1e-3, atol=1e-3)
    np.testing.assert_allclose(np.asarray(local_loss), np.asarray(ref_ll), rtol=1e-3, atol=1e-3)

    # bf16 path: native-dtype MXU operands, no wrapper-side upcast
    in_b = inputs.astype(jnp.bfloat16)
    lf_b = local_features.astype(jnp.bfloat16)
    gl_b, ll_b = fn(in_b, targets, lf_b)
    jax.block_until_ready((gl_b, ll_b))
    ref_gl_b, ref_ll_b = _reference(in_b, targets, lf_b)
    np.testing.assert_allclose(np.asarray(gl_b), np.asarray(ref_gl_b), rtol=1e-2, atol=1e-2)
    np.testing.assert_allclose(np.asarray(ll_b), np.asarray(ref_ll_b), rtol=1e-2, atol=1e-2)

    print("KERNEL_OK")
</pallas_src>

<mosaic_0001>
module attributes {stable_mosaic.version = 11 : i64} {
  func.func @fused_triplet_kernel(%arg0: i32, %arg1: memref<8x1xi32, #tpu.memory_space<vmem>>, %arg2: memref<1x8xi32, #tpu.memory_space<vmem>>, %arg3: memref<8x32xf32, #tpu.memory_space<vmem>>, %arg4: memref<8x32xf32, #tpu.memory_space<vmem>>, %arg5: memref<128x8xf32, #tpu.memory_space<vmem>>, %arg6: memref<128x8xf32, #tpu.memory_space<vmem>>, %arg7: memref<1x1x1xf32, #tpu.memory_space<vmem>>, %arg8: memref<1x1x1xf32, #tpu.memory_space<vmem>>) attributes {dimension_semantics = [#tpu.dimension_semantics<parallel>], iteration_bounds = array<i64: 1>, scalar_prefetch = 0 : i64, scratch_operands = 0 : i64, tpu.core_type = #tpu.core_type<tc>, window_params = [{pipeline_mode = #tpu.pipeline_mode<synchronous>, transform_indices = @transform_0, window_bounds = array<i64: 8, 1>}, {transform_indices = @transform_1, window_bounds = array<i64: 1, 8>}, {pipeline_mode = #tpu.pipeline_mode<synchronous>, transform_indices = @transform_2, window_bounds = array<i64: 8, 32>}, {transform_indices = @transform_3, window_bounds = array<i64: 8, 32>}, {pipeline_mode = #tpu.pipeline_mode<synchronous>, transform_indices = @transform_4, window_bounds = array<i64: 128, 8>}, {transform_indices = @transform_5, window_bounds = array<i64: 128, 8>}, {transform_indices = @transform_6, window_bounds = array<i64: 1, 1, 1>}, {transform_indices = @transform_7, window_bounds = array<i64: 1, 1, 1>}]} {
    %c0 = arith.constant 0 : index
    %c0_0 = arith.constant 0 : index
    %0 = vector.load %arg3[%c0, %c0_0] : memref<8x32xf32, #tpu.memory_space<vmem>>, vector<8x32xf32>
    %c0_1 = arith.constant 0 : index
    %c0_2 = arith.constant 0 : index
    %1 = vector.load %arg4[%c0_1, %c0_2] : memref<8x32xf32, #tpu.memory_space<vmem>>, vector<8x32xf32>
    %2 = arith.mulf %0, %0 : vector<8x32xf32>
    %cst = arith.constant dense<0.000000e+00> : vector<8xf32>
    %3 = vector.multi_reduction <add>, %2, %cst [1] : vector<8x32xf32> to vector<8xf32>
    %4 = vector.shape_cast %3 : vector<8xf32> to vector<8x1xf32>
    %cst_3 = arith.constant 1.000000e+00 : f32
    %5 = vector.broadcast %cst_3 : f32 to vector<1x32xf32>
    %6 = arith.mulf %1, %1 : vector<8x32xf32>
    %cst_4 = arith.constant dense<0.000000e+00> : vector<1x8xf32>
    %7 = tpu.matmul %5, %6, %cst_4 {dimension_numbers = #tpu.dot_dimension_numbers<[1], [1], [0], [0], [0, 0, 1, 0], [], []>} : vector<1x32xf32>, vector<8x32xf32>, vector<1x8xf32> -> vector<1x8xf32>
    %c0_5 = arith.constant 0 : index
    %c0_6 = arith.constant 0 : index
    %8 = vector.load %arg3[%c0_5, %c0_6] : memref<8x32xf32, #tpu.memory_space<vmem>>, vector<8x32xf32>
    %c0_7 = arith.constant 0 : index
    %c0_8 = arith.constant 0 : index
    %9 = vector.load %arg4[%c0_7, %c0_8] : memref<8x32xf32, #tpu.memory_space<vmem>>, vector<8x32xf32>
    %cst_9 = arith.constant dense<0.000000e+00> : vector<8x8xf32>
    %10 = tpu.matmul %8, %9, %cst_9 {dimension_numbers = #tpu.dot_dimension_numbers<[1], [1], [0], [0], [0, 0, 1, 0], [], []>} : vector<8x32xf32>, vector<8x32xf32>, vector<8x8xf32> -> vector<8x8xf32>
    %11 = vector.broadcast %4 : vector<8x1xf32> to vector<8x8xf32>
    %12 = vector.broadcast %7 : vector<1x8xf32> to vector<8x8xf32>
    %13 = arith.addf %11, %12 : vector<8x8xf32>
    %cst_10 = arith.constant 2.000000e+00 : f32
    %14 = vector.broadcast %cst_10 : f32 to vector<8x8xf32>
    %15 = arith.mulf %14, %10 : vector<8x8xf32>
    %16 = arith.subf %13, %15 : vector<8x8xf32>
    %cst_11 = arith.constant 9.99999996E-13 : f32
    %17 = vector.broadcast %cst_11 : f32 to vector<8x8xf32>
    %18 = arith.maximumf %16, %17 : vector<8x8xf32>
    %19 = math.sqrt %18 : vector<8x8xf32>
    %c0_12 = arith.constant 0 : index
    %c0_13 = arith.constant 0 : index
    %20 = vector.load %arg1[%c0_12, %c0_13] : memref<8x1xi32, #tpu.memory_space<vmem>>, vector<8x1xi32>
    %c0_14 = arith.constant 0 : index
    %c0_15 = arith.constant 0 : index
    %21 = vector.load %arg2[%c0_14, %c0_15] : memref<1x8xi32, #tpu.memory_space<vmem>>, vector<1x8xi32>
    %22 = vector.broadcast %20 : vector<8x1xi32> to vector<8x8xi32>
    %23 = vector.broadcast %21 : vector<1x8xi32> to vector<8x8xi32>
    %24 = arith.cmpi eq, %22, %23 : vector<8x8xi32>
    %cst_16 = arith.constant 0.000000e+00 : f32
    %cst_17 = arith.constant 1.000000e+30 : f32
    %25 = arith.subf %cst_16, %cst_17 : f32
    %26 = vector.broadcast %25 : f32 to vector<8x8xf32>
    %27 = arith.select %24, %19, %26 : vector<8x8xi1>, vector<8x8xf32>
    %cst_18 = arith.constant 1.000000e+30 : f32
    %28 = vector.broadcast %cst_18 : f32 to vector<8x8xf32>
    %29 = arith.select %24, %28, %19 : vector<8x8xi1>, vector<8x8xf32>
    %cst_19 = arith.constant dense<0xFF800000> : vector<8xf32>
    %30 = vector.multi_reduction <maximumf>, %27, %cst_19 [0] : vector<8x8xf32> to vector<8xf32>
    %31 = vector.shape_cast %30 : vector<8xf32> to vector<1x8xf32>
    %cst_20 = arith.constant dense<0x7F800000> : vector<8xf32>
    %32 = vector.multi_reduction <minimumf>, %29, %cst_20 [0] : vector<8x8xf32> to vector<8xf32>
    %33 = vector.shape_cast %32 : vector<8xf32> to vector<1x8xf32>
    %34 = tpu.iota {dimensions = array<i32: 0>} : vector<8x8xi32>
    %35 = arith.sitofp %34 : vector<8x8xi32> to vector<8x8xf32>
    %36 = vector.broadcast %31 : vector<1x8xf32> to vector<8x8xf32>
    %37 = arith.cmpf oeq, %27, %36 : vector<8x8xf32>
    %cst_21 = arith.constant 8.000000e+00 : f32
    %38 = vector.broadcast %cst_21 : f32 to vector<8x8xf32>
    %39 = arith.select %37, %35, %38 : vector<8x8xi1>, vector<8x8xf32>
    %cst_22 = arith.constant dense<0x7F800000> : vector<8xf32>
    %40 = vector.multi_reduction <minimumf>, %39, %cst_22 [0] : vector<8x8xf32> to vector<8xf32>
    %41 = vector.shape_cast %40 : vector<8xf32> to vector<1x8xf32>
    %42 = vector.broadcast %33 : vector<1x8xf32> to vector<8x8xf32>
    %43 = arith.cmpf oeq, %29, %42 : vector<8x8xf32>
    %cst_23 = arith.constant 8.000000e+00 : f32
    %44 = vector.broadcast %cst_23 : f32 to vector<8x8xf32>
    %45 = arith.select %43, %35, %44 : vector<8x8xi1>, vector<8x8xf32>
    %cst_24 = arith.constant dense<0x7F800000> : vector<8xf32>
    %46 = vector.multi_reduction <minimumf>, %45, %cst_24 [0] : vector<8x8xf32> to vector<8xf32>
    %47 = vector.shape_cast %46 : vector<8xf32> to vector<1x8xf32>
    %48 = tpu.concatenate %41, %47 in 1 : vector<1x8xf32>, vector<1x8xf32> -> vector<1x16xf32>
    %49 = tpu.iota {dimensions = array<i32: 0>} : vector<8x16xi32>
    %50 = arith.sitofp %49 : vector<8x16xi32> to vector<8x16xf32>
    %51 = vector.broadcast %48 : vector<1x16xf32> to vector<8x16xf32>
    %52 = arith.cmpf oeq, %50, %51 : vector<8x16xf32>
    %53 = arith.extui %52 : vector<8x16xi1> to vector<8x16xi32>
    %54 = arith.sitofp %53 : vector<8x16xi32> to vector<8x16xf32>
    %c0_25 = arith.constant 0 : index
    %c0_26 = arith.constant 0 : index
    %55 = vector.load %arg5[%c0_25, %c0_26] : memref<128x8xf32, #tpu.memory_space<vmem>>, vector<128x8xf32>
    %cst_27 = arith.constant dense<0.000000e+00> : vector<128x16xf32>
    %56 = tpu.matmul %55, %54, %cst_27 {dimension_numbers = #tpu.dot_dimension_numbers<[1], [0], [0], [1], [0, 0, 1, 1], [], []>} : vector<128x8xf32>, vector<8x16xf32>, vector<128x16xf32> -> vector<128x16xf32>
    %c0_28 = arith.constant 0 : index
    %c0_29 = arith.constant 0 : index
    %57 = vector.load %arg6[%c0_28, %c0_29] : memref<128x8xf32, #tpu.memory_space<vmem>>, vector<128x8xf32>
    %58 = tpu.concatenate %57, %57 in 1 : vector<128x8xf32>, vector<128x8xf32> -> vector<128x16xf32>
    %59 = vector.extract_strided_slice %56 {offsets = [0, 0], sizes = [16, 16], strides = [1, 1]} : vector<128x16xf32> to vector<16x16xf32>
    %60 = vector.shape_cast %59 : vector<16x16xf32> to vector<1x16x16xf32>
    %61 = vector.extract_strided_slice %56 {offsets = [16, 0], sizes = [16, 16], strides = [1, 1]} : vector<128x16xf32> to vector<16x16xf32>
    %62 = vector.shape_cast %61 : vector<16x16xf32> to vector<1x16x16xf32>
    %63 = vector.extract_strided_slice %56 {offsets = [32, 0], sizes = [16, 16], strides = [1, 1]} : vector<128x16xf32> to vector<16x16xf32>
    %64 = vector.shape_cast %63 : vector<16x16xf32> to vector<1x16x16xf32>
    %65 = vector.extract_strided_slice %56 {offsets = [48, 0], sizes = [16, 16], strides = [1, 1]} : vector<128x16xf32> to vector<16x16xf32>
    %66 = vector.shape_cast %65 : vector<16x16xf32> to vector<1x16x16xf32>
    %67 = vector.extract_strided_slice %56 {offsets = [64, 0], sizes = [16, 16], strides = [1, 1]} : vector<128x16xf32> to vector<16x16xf32>
    %68 = vector.shape_cast %67 : vector<16x16xf32> to vector<1x16x16xf32>
    %69 = vector.extract_strided_slice %56 {offsets = [80, 0], sizes = [16, 16], strides = [1, 1]} : vector<128x16xf32> to vector<16x16xf32>
    %70 = vector.shape_cast %69 : vector<16x16xf32> to vector<1x16x16xf32>
    %71 = vector.extract_strided_slice %56 {offsets = [96, 0], sizes = [16, 16], strides = [1, 1]} : vector<128x16xf32> to vector<16x16xf32>
    %72 = vector.shape_cast %71 : vector<16x16xf32> to vector<1x16x16xf32>
    %73 = vector.extract_strided_slice %56 {offsets = [112, 0], sizes = [16, 16], strides = [1, 1]} : vector<128x16xf32> to vector<16x16xf32>
    %74 = vector.shape_cast %73 : vector<16x16xf32> to vector<1x16x16xf32>
    %75 = tpu.concatenate %60, %62, %64, %66, %68, %70, %72, %74 in 0 : vector<1x16x16xf32>, vector<1x16x16xf32>, vector<1x16x16xf32>, vector<1x16x16xf32>, vector<1x16x16xf32>, vector<1x16x16xf32>, vector<1x16x16xf32>, vector<1x16x16xf32> -> vector<8x16x16xf32>
    %76 = arith.mulf %75, %75 : vector<8x16x16xf32>
    %cst_30 = arith.constant dense<0.000000e+00> : vector<8x16xf32>
    %77 = vector.multi_reduction <add>, %76, %cst_30 [1] : vector<8x16x16xf32> to vector<8x16xf32>
    %78 = vector.extract_strided_slice %57 {offsets = [0, 0], sizes = [16, 8], strides = [1, 1]} : vector<128x8xf32> to vector<16x8xf32>
    %79 = vector.extract_strided_slice %57 {offsets = [0, 0], sizes = [16, 8], strides = [1, 1]} : vector<128x8xf32> to vector<16x8xf32>
    %80 = arith.mulf %78, %79 : vector<16x8xf32>
    %cst_31 = arith.constant dense<0.000000e+00> : vector<8xf32>
    %81 = vector.multi_reduction <add>, %80, %cst_31 [0] : vector<16x8xf32> to vector<8xf32>
    %82 = vector.shape_cast %81 : vector<8xf32> to vector<1x8xf32>
    %83 = vector.extract_strided_slice %57 {offsets = [16, 0], sizes = [16, 8], strides = [1, 1]} : vector<128x8xf32> to vector<16x8xf32>
    %84 = vector.extract_strided_slice %57 {offsets = [16, 0], sizes = [16, 8], strides = [1, 1]} : vector<128x8xf32> to vector<16x8xf32>
    %85 = arith.mulf %83, %84 : vector<16x8xf32>
    %cst_32 = arith.constant dense<0.000000e+00> : vector<8xf32>
    %86 = vector.multi_reduction <add>, %85, %cst_32 [0] : vector<16x8xf32> to vector<8xf32>
    %87 = vector.shape_cast %86 : vector<8xf32> to vector<1x8xf32>
    %88 = vector.extract_strided_slice %57 {offsets = [32, 0], sizes = [16, 8], strides = [1, 1]} : vector<128x8xf32> to vector<16x8xf32>
    %89 = vector.extract_strided_slice %57 {offsets = [32, 0], sizes = [16, 8], strides = [1, 1]} : vector<128x8xf32> to vector<16x8xf32>
    %90 = arith.mulf %88, %89 : vector<16x8xf32>
    %cst_33 = arith.constant dense<0.000000e+00> : vector<8xf32>
    %91 = vector.multi_reduction <add>, %90, %cst_33 [0] : vector<16x8xf32> to vector<8xf32>
    %92 = vector.shape_cast %91 : vector<8xf32> to vector<1x8xf32>
    %93 = vector.extract_strided_slice %57 {offsets = [48, 0], sizes = [16, 8], strides = [1, 1]} : vector<128x8xf32> to vector<16x8xf32>
    %94 = vector.extract_strided_slice %57 {offsets = [48, 0], sizes = [16, 8], strides = [1, 1]} : vector<128x8xf32> to vector<16x8xf32>
    %95 = arith.mulf %93, %94 : vector<16x8xf32>
    %cst_34 = arith.constant dense<0.000000e+00> : vector<8xf32>
    %96 = vector.multi_reduction <add>, %95, %cst_34 [0] : vector<16x8xf32> to vector<8xf32>
    %97 = vector.shape_cast %96 : vector<8xf32> to vector<1x8xf32>
    %98 = vector.extract_strided_slice %57 {offsets = [64, 0], sizes = [16, 8], strides = [1, 1]} : vector<128x8xf32> to vector<16x8xf32>
    %99 = vector.extract_strided_slice %57 {offsets = [64, 0], sizes = [16, 8], strides = [1, 1]} : vector<128x8xf32> to vector<16x8xf32>
    %100 = arith.mulf %98, %99 : vector<16x8xf32>
    %cst_35 = arith.constant dense<0.000000e+00> : vector<8xf32>
    %101 = vector.multi_reduction <add>, %100, %cst_35 [0] : vector<16x8xf32> to vector<8xf32>
    %102 = vector.shape_cast %101 : vector<8xf32> to vector<1x8xf32>
    %103 = vector.extract_strided_slice %57 {offsets = [80, 0], sizes = [16, 8], strides = [1, 1]} : vector<128x8xf32> to vector<16x8xf32>
    %104 = vector.extract_strided_slice %57 {offsets = [80, 0], sizes = [16, 8], strides = [1, 1]} : vector<128x8xf32> to vector<16x8xf32>
    %105 = arith.mulf %103, %104 : vector<16x8xf32>
    %cst_36 = arith.constant dense<0.000000e+00> : vector<8xf32>
    %106 = vector.multi_reduction <add>, %105, %cst_36 [0] : vector<16x8xf32> to vector<8xf32>
    %107 = vector.shape_cast %106 : vector<8xf32> to vector<1x8xf32>
    %108 = vector.extract_strided_slice %57 {offsets = [96, 0], sizes = [16, 8], strides = [1, 1]} : vector<128x8xf32> to vector<16x8xf32>
    %109 = vector.extract_strided_slice %57 {offsets = [96, 0], sizes = [16, 8], strides = [1, 1]} : vector<128x8xf32> to vector<16x8xf32>
    %110 = arith.mulf %108, %109 : vector<16x8xf32>
    %cst_37 = arith.constant dense<0.000000e+00> : vector<8xf32>
    %111 = vector.multi_reduction <add>, %110, %cst_37 [0] : vector<16x8xf32> to vector<8xf32>
    %112 = vector.shape_cast %111 : vector<8xf32> to vector<1x8xf32>
    %113 = vector.extract_strided_slice %57 {offsets = [112, 0], sizes = [16, 8], strides = [1, 1]} : vector<128x8xf32> to vector<16x8xf32>
    %114 = vector.extract_strided_slice %57 {offsets = [112, 0], sizes = [16, 8], strides = [1, 1]} : vector<128x8xf32> to vector<16x8xf32>
    %115 = arith.mulf %113, %114 : vector<16x8xf32>
    %cst_38 = arith.constant dense<0.000000e+00> : vector<8xf32>
    %116 = vector.multi_reduction <add>, %115, %cst_38 [0] : vector<16x8xf32> to vector<8xf32>
    %117 = vector.shape_cast %116 : vector<8xf32> to vector<1x8xf32>
    %118 = tpu.concatenate %82, %87, %92, %97, %102, %107, %112, %117 in 0 : vector<1x8xf32>, vector<1x8xf32>, vector<1x8xf32>, vector<1x8xf32>, vector<1x8xf32>, vector<1x8xf32>, vector<1x8xf32>, vector<1x8xf32> -> vector<8x8xf32>
    %119 = tpu.concatenate %118, %118 in 1 : vector<8x8xf32>, vector<8x8xf32> -> vector<8x16xf32>
    %120 = tpu.iota {dimensions = array<i32: 0>} : vector<8x16xi32>
    %c0_i32 = arith.constant 0 : i32
    %121 = vector.broadcast %c0_i32 : i32 to vector<8x16xi32>
    %122 = arith.cmpi eq, %120, %121 : vector<8x16xi32>
    %cst_39 = arith.constant 0.000000e+00 : f32
    %cst_40 = arith.constant 1.000000e+30 : f32
    %123 = vector.broadcast %cst_39 : f32 to vector<8x16xf32>
    %124 = vector.broadcast %cst_40 : f32 to vector<8x16xf32>
    %125 = arith.select %122, %123, %124 : vector<8x16xi1>, vector<8x16xf32>
    %126 = vector.extract_strided_slice %58 {offsets = [0, 0], sizes = [16, 16], strides = [1, 1]} : vector<128x16xf32> to vector<16x16xf32>
    %127 = vector.shape_cast %126 : vector<16x16xf32> to vector<1x16x16xf32>
    %128 = vector.broadcast %127 : vector<1x16x16xf32> to vector<8x16x16xf32>
    %129 = arith.mulf %128, %75 : vector<8x16x16xf32>
    %cst_41 = arith.constant dense<0.000000e+00> : vector<8x16xf32>
    %130 = vector.multi_reduction <add>, %129, %cst_41 [1] : vector<8x16x16xf32> to vector<8x16xf32>
    %131 = vector.extract_strided_slice %119 {offsets = [0, 0], sizes = [1, 16], strides = [1, 1]} : vector<8x16xf32> to vector<1x16xf32>
    %132 = vector.broadcast %131 : vector<1x16xf32> to vector<8x16xf32>
    %133 = arith.addf %132, %77 : vector<8x16xf32>
    %cst_42 = arith.constant 2.000000e+00 : f32
    %134 = vector.broadcast %cst_42 : f32 to vector<8x16xf32>
    %135 = arith.mulf %134, %130 : vector<8x16xf32>
    %136 = arith.subf %133, %135 : vector<8x16xf32>
    %cst_43 = arith.constant 9.99999996E-13 : f32
    %137 = vector.broadcast %cst_43 : f32 to vector<8x16xf32>
    %138 = arith.maximumf %136, %137 : vector<8x16xf32>
    %139 = math.sqrt %138 : vector<8x16xf32>
    %cst_44 = arith.constant 5.000000e-01 : f32
    %140 = vector.broadcast %cst_44 : f32 to vector<8x16xf32>
    %141 = arith.mulf %140, %139 : vector<8x16xf32>
    %142 = math.tanh %141 : vector<8x16xf32>
    %c1_i32 = arith.constant 1 : i32
    %143 = tpu.dynamic_rotate %142 by %c1_i32 dim 0 : vector<8x16xf32>, i32 -> vector<8x16xf32>
    %144 = tpu.iota {dimensions = array<i32: 0>} : vector<8x16xi32>
    %c1_i32_45 = arith.constant 1 : i32
    %145 = vector.broadcast %c1_i32_45 : i32 to vector<8x16xi32>
    %146 = arith.cmpi sge, %144, %145 : vector<8x16xi32>
    %cst_46 = arith.constant 0.000000e+00 : f32
    %147 = vector.broadcast %cst_46 : f32 to vector<8x16xf32>
    %148 = arith.select %146, %143, %147 : vector<8x16xi1>, vector<8x16xf32>
    %149 = arith.addf %142, %148 : vector<8x16xf32>
    %c2_i32 = arith.constant 2 : i32
    %150 = tpu.dynamic_rotate %149 by %c2_i32 dim 0 : vector<8x16xf32>, i32 -> vector<8x16xf32>
    %151 = tpu.iota {dimensions = array<i32: 0>} : vector<8x16xi32>
    %c2_i32_47 = arith.constant 2 : i32
    %152 = vector.broadcast %c2_i32_47 : i32 to vector<8x16xi32>
    %153 = arith.cmpi sge, %151, %152 : vector<8x16xi32>
    %cst_48 = arith.constant 0.000000e+00 : f32
    %154 = vector.broadcast %cst_48 : f32 to vector<8x16xf32>
    %155 = arith.select %153, %150, %154 : vector<8x16xi1>, vector<8x16xf32>
    %156 = arith.addf %149, %155 : vector<8x16xf32>
    %c4_i32 = arith.constant 4 : i32
    %157 = tpu.dynamic_rotate %156 by %c4_i32 dim 0 : vector<8x16xf32>, i32 -> vector<8x16xf32>
    %158 = tpu.iota {dimensions = array<i32: 0>} : vector<8x16xi32>
    %c4_i32_49 = arith.constant 4 : i32
    %159 = vector.broadcast %c4_i32_49 : i32 to vector<8x16xi32>
    %160 = arith.cmpi sge, %158, %159 : vector<8x16xi32>
    %cst_50 = arith.constant 0.000000e+00 : f32
    %161 = vector.broadcast %cst_50 : f32 to vector<8x16xf32>
    %162 = arith.select %160, %157, %161 : vector<8x16xi1>, vector<8x16xf32>
    %163 = arith.addf %156, %162 : vector<8x16xf32>
    %164 = arith.subf %125, %163 : vector<8x16xf32>
    %165 = arith.addf %164, %142 : vector<8x16xf32>
    %c1_i32_51 = arith.constant 1 : i32
    %166 = tpu.dynamic_rotate %165 by %c1_i32_51 dim 0 : vector<8x16xf32>, i32 -> vector<8x16xf32>
    %167 = tpu.iota {dimensions = array<i32: 0>} : vector<8x16xi32>
    %c1_i32_52 = arith.constant 1 : i32
    %168 = vector.broadcast %c1_i32_52 : i32 to vector<8x16xi32>
    %169 = arith.cmpi sge, %167, %168 : vector<8x16xi32>
    %cst_53 = arith.constant 1.000000e+30 : f32
    %170 = vector.broadcast %cst_53 : f32 to vector<8x16xf32>
    %171 = arith.select %169, %166, %170 : vector<8x16xi1>, vector<8x16xf32>
    %172 = arith.minimumf %165, %171 : vector<8x16xf32>
    %c2_i32_54 = arith.constant 2 : i32
    %173 = tpu.dynamic_rotate %172 by %c2_i32_54 dim 0 : vector<8x16xf32>, i32 -> vector<8x16xf32>
    %174 = tpu.iota {dimensions = array<i32: 0>} : vector<8x16xi32>
    %c2_i32_55 = arith.constant 2 : i32
    %175 = vector.broadcast %c2_i32_55 : i32 to vector<8x16xi32>
    %176 = arith.cmpi sge, %174, %175 : vector<8x16xi32>
    %cst_56 = arith.constant 1.000000e+30 : f32
    %177 = vector.broadcast %cst_56 : f32 to vector<8x16xf32>
    %178 = arith.select %176, %173, %177 : vector<8x16xi1>, vector<8x16xf32>
    %179 = arith.minimumf %172, %178 : vector<8x16xf32>
    %c4_i32_57 = arith.constant 4 : i32
    %180 = tpu.dynamic_rotate %179 by %c4_i32_57 dim 0 : vector<8x16xf32>, i32 -> vector<8x16xf32>
    %181 = tpu.iota {dimensions = array<i32: 0>} : vector<8x16xi32>
    %c4_i32_58 = arith.constant 4 : i32
    %182 = vector.broadcast %c4_i32_58 : i32 to vector<8x16xi32>
    %183 = arith.cmpi sge, %181, %182 : vector<8x16xi32>
    %cst_59 = arith.constant 1.000000e+30 : f32
    %184 = vector.broadcast %cst_59 : f32 to vector<8x16xf32>
    %185 = arith.select %183, %180, %184 : vector<8x16xi1>, vector<8x16xf32>
    %186 = arith.minimumf %179, %185 : vector<8x16xf32>
    %187 = arith.addf %163, %186 : vector<8x16xf32>
    %188 = vector.extract_strided_slice %58 {offsets = [16, 0], sizes = [16, 16], strides = [1, 1]} : vector<128x16xf32> to vector<16x16xf32>
    %189 = vector.shape_cast %188 : vector<16x16xf32> to vector<1x16x16xf32>
    %190 = vector.broadcast %189 : vector<1x16x16xf32> to vector<8x16x16xf32>
    %191 = arith.mulf %190, %75 : vector<8x16x16xf32>
    %cst_60 = arith.constant dense<0.000000e+00> : vector<8x16xf32>
    %192 = vector.multi_reduction <add>, %191, %cst_60 [1] : vector<8x16x16xf32> to vector<8x16xf32>
    %193 = vector.extract_strided_slice %119 {offsets = [1, 0], sizes = [1, 16], strides = [1, 1]} : vector<8x16xf32> to vector<1x16xf32>
    %194 = vector.broadcast %193 : vector<1x16xf32> to vector<8x16xf32>
    %195 = arith.addf %194, %77 : vector<8x16xf32>
    %cst_61 = arith.constant 2.000000e+00 : f32
    %196 = vector.broadcast %cst_61 : f32 to vector<8x16xf32>
    %197 = arith.mulf %196, %192 : vector<8x16xf32>
    %198 = arith.subf %195, %197 : vector<8x16xf32>
    %cst_62 = arith.constant 9.99999996E-13 : f32
    %199 = vector.broadcast %cst_62 : f32 to vector<8x16xf32>
    %200 = arith.maximumf %198, %199 : vector<8x16xf32>
    %201 = math.sqrt %200 : vector<8x16xf32>
    %cst_63 = arith.constant 5.000000e-01 : f32
    %202 = vector.broadcast %cst_63 : f32 to vector<8x16xf32>
    %203 = arith.mulf %202, %201 : vector<8x16xf32>
    %204 = math.tanh %203 : vector<8x16xf32>
    %c1_i32_64 = arith.constant 1 : i32
    %205 = tpu.dynamic_rotate %204 by %c1_i32_64 dim 0 : vector<8x16xf32>, i32 -> vector<8x16xf32>
    %206 = tpu.iota {dimensions = array<i32: 0>} : vector<8x16xi32>
    %c1_i32_65 = arith.constant 1 : i32
    %207 = vector.broadcast %c1_i32_65 : i32 to vector<8x16xi32>
    %208 = arith.cmpi sge, %206, %207 : vector<8x16xi32>
    %cst_66 = arith.constant 0.000000e+00 : f32
    %209 = vector.broadcast %cst_66 : f32 to vector<8x16xf32>
    %210 = arith.select %208, %205, %209 : vector<8x16xi1>, vector<8x16xf32>
    %211 = arith.addf %204, %210 : vector<8x16xf32>
    %c2_i32_67 = arith.constant 2 : i32
    %212 = tpu.dynamic_rotate %211 by %c2_i32_67 dim 0 : vector<8x16xf32>, i32 -> vector<8x16xf32>
    %213 = tpu.iota {dimensions = array<i32: 0>} : vector<8x16xi32>
    %c2_i32_68 = arith.constant 2 : i32
    %214 = vector.broadcast %c2_i32_68 : i32 to vector<8x16xi32>
    %215 = arith.cmpi sge, %213, %214 : vector<8x16xi32>
    %cst_69 = arith.constant 0.000000e+00 : f32
    %216 = vector.broadcast %cst_69 : f32 to vector<8x16xf32>
    %217 = arith.select %215, %212, %216 : vector<8x16xi1>, vector<8x16xf32>
    %218 = arith.addf %211, %217 : vector<8x16xf32>
    %c4_i32_70 = arith.constant 4 : i32
    %219 = tpu.dynamic_rotate %218 by %c4_i32_70 dim 0 : vector<8x16xf32>, i32 -> vector<8x16xf32>
    %220 = tpu.iota {dimensions = array<i32: 0>} : vector<8x16xi32>
    %c4_i32_71 = arith.constant 4 : i32
    %221 = vector.broadcast %c4_i32_71 : i32 to vector<8x16xi32>
    %222 = arith.cmpi sge, %220, %221 : vector<8x16xi32>
    %cst_72 = arith.constant 0.000000e+00 : f32
    %223 = vector.broadcast %cst_72 : f32 to vector<8x16xf32>
    %224 = arith.select %222, %219, %223 : vector<8x16xi1>, vector<8x16xf32>
    %225 = arith.addf %218, %224 : vector<8x16xf32>
    %226 = arith.subf %187, %225 : vector<8x16xf32>
    %227 = arith.addf %226, %204 : vector<8x16xf32>
    %c1_i32_73 = arith.constant 1 : i32
    %228 = tpu.dynamic_rotate %227 by %c1_i32_73 dim 0 : vector<8x16xf32>, i32 -> vector<8x16xf32>
    %229 = tpu.iota {dimensions = array<i32: 0>} : vector<8x16xi32>
    %c1_i32_74 = arith.constant 1 : i32
    %230 = vector.broadcast %c1_i32_74 : i32 to vector<8x16xi32>
    %231 = arith.cmpi sge, %229, %230 : vector<8x16xi32>
    %cst_75 = arith.constant 1.000000e+30 : f32
    %232 = vector.broadcast %cst_75 : f32 to vector<8x16xf32>
    %233 = arith.select %231, %228, %232 : vector<8x16xi1>, vector<8x16xf32>
    %234 = arith.minimumf %227, %233 : vector<8x16xf32>
    %c2_i32_76 = arith.constant 2 : i32
    %235 = tpu.dynamic_rotate %234 by %c2_i32_76 dim 0 : vector<8x16xf32>, i32 -> vector<8x16xf32>
    %236 = tpu.iota {dimensions = array<i32: 0>} : vector<8x16xi32>
    %c2_i32_77 = arith.constant 2 : i32
    %237 = vector.broadcast %c2_i32_77 : i32 to vector<8x16xi32>
    %238 = arith.cmpi sge, %236, %237 : vector<8x16xi32>
    %cst_78 = arith.constant 1.000000e+30 : f32
    %239 = vector.broadcast %cst_78 : f32 to vector<8x16xf32>
    %240 = arith.select %238, %235, %239 : vector<8x16xi1>, vector<8x16xf32>
    %241 = arith.minimumf %234, %240 : vector<8x16xf32>
    %c4_i32_79 = arith.constant 4 : i32
    %242 = tpu.dynamic_rotate %241 by %c4_i32_79 dim 0 : vector<8x16xf32>, i32 -> vector<8x16xf32>
    %243 = tpu.iota {dimensions = array<i32: 0>} : vector<8x16xi32>
    %c4_i32_80 = arith.constant 4 : i32
    %244 = vector.broadcast %c4_i32_80 : i32 to vector<8x16xi32>
    %245 = arith.cmpi sge, %243, %244 : vector<8x16xi32>
    %cst_81 = arith.constant 1.000000e+30 : f32
    %246 = vector.broadcast %cst_81 : f32 to vector<8x16xf32>
    %247 = arith.select %245, %242, %246 : vector<8x16xi1>, vector<8x16xf32>
    %248 = arith.minimumf %241, %247 : vector<8x16xf32>
    %249 = arith.addf %225, %248 : vector<8x16xf32>
    %250 = vector.extract_strided_slice %58 {offsets = [32, 0], sizes = [16, 16], strides = [1, 1]} : vector<128x16xf32> to vector<16x16xf32>
    %251 = vector.shape_cast %250 : vector<16x16xf32> to vector<1x16x16xf32>
    %252 = vector.broadcast %251 : vector<1x16x16xf32> to vector<8x16x16xf32>
    %253 = arith.mulf %252, %75 : vector<8x16x16xf32>
    %cst_82 = arith.constant dense<0.000000e+00> : vector<8x16xf32>
    %254 = vector.multi_reduction <add>, %253, %cst_82 [1] : vector<8x16x16xf32> to vector<8x16xf32>
    %255 = vector.extract_strided_slice %119 {offsets = [2, 0], sizes = [1, 16], strides = [1, 1]} : vector<8x16xf32> to vector<1x16xf32>
    %256 = vector.broadcast %255 : vector<1x16xf32> to vector<8x16xf32>
    %257 = arith.addf %256, %77 : vector<8x16xf32>
    %cst_83 = arith.constant 2.000000e+00 : f32
    %258 = vector.broadcast %cst_83 : f32 to vector<8x16xf32>
    %259 = arith.mulf %258, %254 : vector<8x16xf32>
    %260 = arith.subf %257, %259 : vector<8x16xf32>
    %cst_84 = arith.constant 9.99999996E-13 : f32
    %261 = vector.broadcast %cst_84 : f32 to vector<8x16xf32>
    %262 = arith.maximumf %260, %261 : vector<8x16xf32>
    %263 = math.sqrt %262 : vector<8x16xf32>
    %cst_85 = arith.constant 5.000000e-01 : f32
    %264 = vector.broadcast %cst_85 : f32 to vector<8x16xf32>
    %265 = arith.mulf %264, %263 : vector<8x16xf32>
    %266 = math.tanh %265 : vector<8x16xf32>
    %c1_i32_86 = arith.constant 1 : i32
    %267 = tpu.dynamic_rotate %266 by %c1_i32_86 dim 0 : vector<8x16xf32>, i32 -> vector<8x16xf32>
    %268 = tpu.iota {dimensions = array<i32: 0>} : vector<8x16xi32>
    %c1_i32_87 = arith.constant 1 : i32
    %269 = vector.broadcast %c1_i32_87 : i32 to vector<8x16xi32>
    %270 = arith.cmpi sge, %268, %269 : vector<8x16xi32>
    %cst_88 = arith.constant 0.000000e+00 : f32
    %271 = vector.broadcast %cst_88 : f32 to vector<8x16xf32>
    %272 = arith.select %270, %267, %271 : vector<8x16xi1>, vector<8x16xf32>
    %273 = arith.addf %266, %272 : vector<8x16xf32>
    %c2_i32_89 = arith.constant 2 : i32
    %274 = tpu.dynamic_rotate %273 by %c2_i32_89 dim 0 : vector<8x16xf32>, i32 -> vector<8x16xf32>
    %275 = tpu.iota {dimensions = array<i32: 0>} : vector<8x16xi32>
    %c2_i32_90 = arith.constant 2 : i32
    %276 = vector.broadcast %c2_i32_90 : i32 to vector<8x16xi32>
    %277 = arith.cmpi sge, %275, %276 : vector<8x16xi32>
    %cst_91 = arith.constant 0.000000e+00 : f32
    %278 = vector.broadcast %cst_91 : f32 to vector<8x16xf32>
    %279 = arith.select %277, %274, %278 : vector<8x16xi1>, vector<8x16xf32>
    %280 = arith.addf %273, %279 : vector<8x16xf32>
    %c4_i32_92 = arith.constant 4 : i32
    %281 = tpu.dynamic_rotate %280 by %c4_i32_92 dim 0 : vector<8x16xf32>, i32 -> vector<8x16xf32>
    %282 = tpu.iota {dimensions = array<i32: 0>} : vector<8x16xi32>
    %c4_i32_93 = arith.constant 4 : i32
    %283 = vector.broadcast %c4_i32_93 : i32 to vector<8x16xi32>
    %284 = arith.cmpi sge, %282, %283 : vector<8x16xi32>
    %cst_94 = arith.constant 0.000000e+00 : f32
    %285 = vector.broadcast %cst_94 : f32 to vector<8x16xf32>
    %286 = arith.select %284, %281, %285 : vector<8x16xi1>, vector<8x16xf32>
    %287 = arith.addf %280, %286 : vector<8x16xf32>
    %288 = arith.subf %249, %287 : vector<8x16xf32>
    %289 = arith.addf %288, %266 : vector<8x16xf32>
    %c1_i32_95 = arith.constant 1 : i32
    %290 = tpu.dynamic_rotate %289 by %c1_i32_95 dim 0 : vector<8x16xf32>, i32 -> vector<8x16xf32>
    %291 = tpu.iota {dimensions = array<i32: 0>} : vector<8x16xi32>
    %c1_i32_96 = arith.constant 1 : i32
    %292 = vector.broadcast %c1_i32_96 : i32 to vector<8x16xi32>
    %293 = arith.cmpi sge, %291, %292 : vector<8x16xi32>
    %cst_97 = arith.constant 1.000000e+30 : f32
    %294 = vector.broadcast %cst_97 : f32 to vector<8x16xf32>
    %295 = arith.select %293, %290, %294 : vector<8x16xi1>, vector<8x16xf32>
    %296 = arith.minimumf %289, %295 : vector<8x16xf32>
    %c2_i32_98 = arith.constant 2 : i32
    %297 = tpu.dynamic_rotate %296 by %c2_i32_98 dim 0 : vector<8x16xf32>, i32 -> vector<8x16xf32>
    %298 = tpu.iota {dimensions = array<i32: 0>} : vector<8x16xi32>
    %c2_i32_99 = arith.constant 2 : i32
    %299 = vector.broadcast %c2_i32_99 : i32 to vector<8x16xi32>
    %300 = arith.cmpi sge, %298, %299 : vector<8x16xi32>
    %cst_100 = arith.constant 1.000000e+30 : f32
    %301 = vector.broadcast %cst_100 : f32 to vector<8x16xf32>
    %302 = arith.select %300, %297, %301 : vector<8x16xi1>, vector<8x16xf32>
    %303 = arith.minimumf %296, %302 : vector<8x16xf32>
    %c4_i32_101 = arith.constant 4 : i32
    %304 = tpu.dynamic_rotate %303 by %c4_i32_101 dim 0 : vector<8x16xf32>, i32 -> vector<8x16xf32>
    %305 = tpu.iota {dimensions = array<i32: 0>} : vector<8x16xi32>
    %c4_i32_102 = arith.constant 4 : i32
    %306 = vector.broadcast %c4_i32_102 : i32 to vector<8x16xi32>
    %307 = arith.cmpi sge, %305, %306 : vector<8x16xi32>
    %cst_103 = arith.constant 1.000000e+30 : f32
    %308 = vector.broadcast %cst_103 : f32 to vector<8x16xf32>
    %309 = arith.select %307, %304, %308 : vector<8x16xi1>, vector<8x16xf32>
    %310 = arith.minimumf %303, %309 : vector<8x16xf32>
    %311 = arith.addf %287, %310 : vector<8x16xf32>
    %312 = vector.extract_strided_slice %58 {offsets = [48, 0], sizes = [16, 16], strides = [1, 1]} : vector<128x16xf32> to vector<16x16xf32>
    %313 = vector.shape_cast %312 : vector<16x16xf32> to vector<1x16x16xf32>
    %314 = vector.broadcast %313 : vector<1x16x16xf32> to vector<8x16x16xf32>
    %315 = arith.mulf %314, %75 : vector<8x16x16xf32>
    %cst_104 = arith.constant dense<0.000000e+00> : vector<8x16xf32>
    %316 = vector.multi_reduction <add>, %315, %cst_104 [1] : vector<8x16x16xf32> to vector<8x16xf32>
    %317 = vector.extract_strided_slice %119 {offsets = [3, 0], sizes = [1, 16], strides = [1, 1]} : vector<8x16xf32> to vector<1x16xf32>
    %318 = vector.broadcast %317 : vector<1x16xf32> to vector<8x16xf32>
    %319 = arith.addf %318, %77 : vector<8x16xf32>
    %cst_105 = arith.constant 2.000000e+00 : f32
    %320 = vector.broadcast %cst_105 : f32 to vector<8x16xf32>
    %321 = arith.mulf %320, %316 : vector<8x16xf32>
    %322 = arith.subf %319, %321 : vector<8x16xf32>
    %cst_106 = arith.constant 9.99999996E-13 : f32
    %323 = vector.broadcast %cst_106 : f32 to vector<8x16xf32>
    %324 = arith.maximumf %322, %323 : vector<8x16xf32>
    %325 = math.sqrt %324 : vector<8x16xf32>
    %cst_107 = arith.constant 5.000000e-01 : f32
    %326 = vector.broadcast %cst_107 : f32 to vector<8x16xf32>
    %327 = arith.mulf %326, %325 : vector<8x16xf32>
    %328 = math.tanh %327 : vector<8x16xf32>
    %c1_i32_108 = arith.constant 1 : i32
    %329 = tpu.dynamic_rotate %328 by %c1_i32_108 dim 0 : vector<8x16xf32>, i32 -> vector<8x16xf32>
    %330 = tpu.iota {dimensions = array<i32: 0>} : vector<8x16xi32>
    %c1_i32_109 = arith.constant 1 : i32
    %331 = vector.broadcast %c1_i32_109 : i32 to vector<8x16xi32>
    %332 = arith.cmpi sge, %330, %331 : vector<8x16xi32>
    %cst_110 = arith.constant 0.000000e+00 : f32
    %333 = vector.broadcast %cst_110 : f32 to vector<8x16xf32>
    %334 = arith.select %332, %329, %333 : vector<8x16xi1>, vector<8x16xf32>
    %335 = arith.addf %328, %334 : vector<8x16xf32>
    %c2_i32_111 = arith.constant 2 : i32
    %336 = tpu.dynamic_rotate %335 by %c2_i32_111 dim 0 : vector<8x16xf32>, i32 -> vector<8x16xf32>
    %337 = tpu.iota {dimensions = array<i32: 0>} : vector<8x16xi32>
    %c2_i32_112 = arith.constant 2 : i32
    %338 = vector.broadcast %c2_i32_112 : i32 to vector<8x16xi32>
    %339 = arith.cmpi sge, %337, %338 : vector<8x16xi32>
    %cst_113 = arith.constant 0.000000e+00 : f32
    %340 = vector.broadcast %cst_113 : f32 to vector<8x16xf32>
    %341 = arith.select %339, %336, %340 : vector<8x16xi1>, vector<8x16xf32>
    %342 = arith.addf %335, %341 : vector<8x16xf32>
    %c4_i32_114 = arith.constant 4 : i32
    %343 = tpu.dynamic_rotate %342 by %c4_i32_114 dim 0 : vector<8x16xf32>, i32 -> vector<8x16xf32>
    %344 = tpu.iota {dimensions = array<i32: 0>} : vector<8x16xi32>
    %c4_i32_115 = arith.constant 4 : i32
    %345 = vector.broadcast %c4_i32_115 : i32 to vector<8x16xi32>
    %346 = arith.cmpi sge, %344, %345 : vector<8x16xi32>
    %cst_116 = arith.constant 0.000000e+00 : f32
    %347 = vector.broadcast %cst_116 : f32 to vector<8x16xf32>
    %348 = arith.select %346, %343, %347 : vector<8x16xi1>, vector<8x16xf32>
    %349 = arith.addf %342, %348 : vector<8x16xf32>
    %350 = arith.subf %311, %349 : vector<8x16xf32>
    %351 = arith.addf %350, %328 : vector<8x16xf32>
    %c1_i32_117 = arith.constant 1 : i32
    %352 = tpu.dynamic_rotate %351 by %c1_i32_117 dim 0 : vector<8x16xf32>, i32 -> vector<8x16xf32>
    %353 = tpu.iota {dimensions = array<i32: 0>} : vector<8x16xi32>
    %c1_i32_118 = arith.constant 1 : i32
    %354 = vector.broadcast %c1_i32_118 : i32 to vector<8x16xi32>
    %355 = arith.cmpi sge, %353, %354 : vector<8x16xi32>
    %cst_119 = arith.constant 1.000000e+30 : f32
    %356 = vector.broadcast %cst_119 : f32 to vector<8x16xf32>
    %357 = arith.select %355, %352, %356 : vector<8x16xi1>, vector<8x16xf32>
    %358 = arith.minimumf %351, %357 : vector<8x16xf32>
    %c2_i32_120 = arith.constant 2 : i32
    %359 = tpu.dynamic_rotate %358 by %c2_i32_120 dim 0 : vector<8x16xf32>, i32 -> vector<8x16xf32>
    %360 = tpu.iota {dimensions = array<i32: 0>} : vector<8x16xi32>
    %c2_i32_121 = arith.constant 2 : i32
    %361 = vector.broadcast %c2_i32_121 : i32 to vector<8x16xi32>
    %362 = arith.cmpi sge, %360, %361 : vector<8x16xi32>
    %cst_122 = arith.constant 1.000000e+30 : f32
    %363 = vector.broadcast %cst_122 : f32 to vector<8x16xf32>
    %364 = arith.select %362, %359, %363 : vector<8x16xi1>, vector<8x16xf32>
    %365 = arith.minimumf %358, %364 : vector<8x16xf32>
    %c4_i32_123 = arith.constant 4 : i32
    %366 = tpu.dynamic_rotate %365 by %c4_i32_123 dim 0 : vector<8x16xf32>, i32 -> vector<8x16xf32>
    %367 = tpu.iota {dimensions = array<i32: 0>} : vector<8x16xi32>
    %c4_i32_124 = arith.constant 4 : i32
    %368 = vector.broadcast %c4_i32_124 : i32 to vector<8x16xi32>
    %369 = arith.cmpi sge, %367, %368 : vector<8x16xi32>
    %cst_125 = arith.constant 1.000000e+30 : f32
    %370 = vector.broadcast %cst_125 : f32 to vector<8x16xf32>
    %371 = arith.select %369, %366, %370 : vector<8x16xi1>, vector<8x16xf32>
    %372 = arith.minimumf %365, %371 : vector<8x16xf32>
    %373 = arith.addf %349, %372 : vector<8x16xf32>
    %374 = vector.extract_strided_slice %58 {offsets = [64, 0], sizes = [16, 16], strides = [1, 1]} : vector<128x16xf32> to vector<16x16xf32>
    %375 = vector.shape_cast %374 : vector<16x16xf32> to vector<1x16x16xf32>
    %376 = vector.broadcast %375 : vector<1x16x16xf32> to vector<8x16x16xf32>
    %377 = arith.mulf %376, %75 : vector<8x16x16xf32>
    %cst_126 = arith.constant dense<0.000000e+00> : vector<8x16xf32>
    %378 = vector.multi_reduction <add>, %377, %cst_126 [1] : vector<8x16x16xf32> to vector<8x16xf32>
    %379 = vector.extract_strided_slice %119 {offsets = [4, 0], sizes = [1, 16], strides = [1, 1]} : vector<8x16xf32> to vector<1x16xf32>
    %380 = vector.broadcast %379 : vector<1x16xf32> to vector<8x16xf32>
    %381 = arith.addf %380, %77 : vector<8x16xf32>
    %cst_127 = arith.constant 2.000000e+00 : f32
    %382 = vector.broadcast %cst_127 : f32 to vector<8x16xf32>
    %383 = arith.mulf %382, %378 : vector<8x16xf32>
    %384 = arith.subf %381, %383 : vector<8x16xf32>
    %cst_128 = arith.constant 9.99999996E-13 : f32
    %385 = vector.broadcast %cst_128 : f32 to vector<8x16xf32>
    %386 = arith.maximumf %384, %385 : vector<8x16xf32>
    %387 = math.sqrt %386 : vector<8x16xf32>
    %cst_129 = arith.constant 5.000000e-01 : f32
    %388 = vector.broadcast %cst_129 : f32 to vector<8x16xf32>
    %389 = arith.mulf %388, %387 : vector<8x16xf32>
    %390 = math.tanh %389 : vector<8x16xf32>
    %c1_i32_130 = arith.constant 1 : i32
    %391 = tpu.dynamic_rotate %390 by %c1_i32_130 dim 0 : vector<8x16xf32>, i32 -> vector<8x16xf32>
    %392 = tpu.iota {dimensions = array<i32: 0>} : vector<8x16xi32>
    %c1_i32_131 = arith.constant 1 : i32
    %393 = vector.broadcast %c1_i32_131 : i32 to vector<8x16xi32>
    %394 = arith.cmpi sge, %392, %393 : vector<8x16xi32>
    %cst_132 = arith.constant 0.000000e+00 : f32
    %395 = vector.broadcast %cst_132 : f32 to vector<8x16xf32>
    %396 = arith.select %394, %391, %395 : vector<8x16xi1>, vector<8x16xf32>
    %397 = arith.addf %390, %396 : vector<8x16xf32>
    %c2_i32_133 = arith.constant 2 : i32
    %398 = tpu.dynamic_rotate %397 by %c2_i32_133 dim 0 : vector<8x16xf32>, i32 -> vector<8x16xf32>
    %399 = tpu.iota {dimensions = array<i32: 0>} : vector<8x16xi32>
    %c2_i32_134 = arith.constant 2 : i32
    %400 = vector.broadcast %c2_i32_134 : i32 to vector<8x16xi32>
    %401 = arith.cmpi sge, %399, %400 : vector<8x16xi32>
    %cst_135 = arith.constant 0.000000e+00 : f32
    %402 = vector.broadcast %cst_135 : f32 to vector<8x16xf32>
    %403 = arith.select %401, %398, %402 : vector<8x16xi1>, vector<8x16xf32>
    %404 = arith.addf %397, %403 : vector<8x16xf32>
    %c4_i32_136 = arith.constant 4 : i32
    %405 = tpu.dynamic_rotate %404 by %c4_i32_136 dim 0 : vector<8x16xf32>, i32 -> vector<8x16xf32>
    %406 = tpu.iota {dimensions = array<i32: 0>} : vector<8x16xi32>
    %c4_i32_137 = arith.constant 4 : i32
    %407 = vector.broadcast %c4_i32_137 : i32 to vector<8x16xi32>
    %408 = arith.cmpi sge, %406, %407 : vector<8x16xi32>
    %cst_138 = arith.constant 0.000000e+00 : f32
    %409 = vector.broadcast %cst_138 : f32 to vector<8x16xf32>
    %410 = arith.select %408, %405, %409 : vector<8x16xi1>, vector<8x16xf32>
    %411 = arith.addf %404, %410 : vector<8x16xf32>
    %412 = arith.subf %373, %411 : vector<8x16xf32>
    %413 = arith.addf %412, %390 : vector<8x16xf32>
    %c1_i32_139 = arith.constant 1 : i32
    %414 = tpu.dynamic_rotate %413 by %c1_i32_139 dim 0 : vector<8x16xf32>, i32 -> vector<8x16xf32>
    %415 = tpu.iota {dimensions = array<i32: 0>} : vector<8x16xi32>
    %c1_i32_140 = arith.constant 1 : i32
    %416 = vector.broadcast %c1_i32_140 : i32 to vector<8x16xi32>
    %417 = arith.cmpi sge, %415, %416 : vector<8x16xi32>
    %cst_141 = arith.constant 1.000000e+30 : f32
    %418 = vector.broadcast %cst_141 : f32 to vector<8x16xf32>
    %419 = arith.select %417, %414, %418 : vector<8x16xi1>, vector<8x16xf32>
    %420 = arith.minimumf %413, %419 : vector<8x16xf32>
    %c2_i32_142 = arith.constant 2 : i32
    %421 = tpu.dynamic_rotate %420 by %c2_i32_142 dim 0 : vector<8x16xf32>, i32 -> vector<8x16xf32>
    %422 = tpu.iota {dimensions = array<i32: 0>} : vector<8x16xi32>
    %c2_i32_143 = arith.constant 2 : i32
    %423 = vector.broadcast %c2_i32_143 : i32 to vector<8x16xi32>
    %424 = arith.cmpi sge, %422, %423 : vector<8x16xi32>
    %cst_144 = arith.constant 1.000000e+30 : f32
    %425 = vector.broadcast %cst_144 : f32 to vector<8x16xf32>
    %426 = arith.select %424, %421, %425 : vector<8x16xi1>, vector<8x16xf32>
    %427 = arith.minimumf %420, %426 : vector<8x16xf32>
    %c4_i32_145 = arith.constant 4 : i32
    %428 = tpu.dynamic_rotate %427 by %c4_i32_145 dim 0 : vector<8x16xf32>, i32 -> vector<8x16xf32>
    %429 = tpu.iota {dimensions = array<i32: 0>} : vector<8x16xi32>
    %c4_i32_146 = arith.constant 4 : i32
    %430 = vector.broadcast %c4_i32_146 : i32 to vector<8x16xi32>
    %431 = arith.cmpi sge, %429, %430 : vector<8x16xi32>
    %cst_147 = arith.constant 1.000000e+30 : f32
    %432 = vector.broadcast %cst_147 : f32 to vector<8x16xf32>
    %433 = arith.select %431, %428, %432 : vector<8x16xi1>, vector<8x16xf32>
    %434 = arith.minimumf %427, %433 : vector<8x16xf32>
    %435 = arith.addf %411, %434 : vector<8x16xf32>
    %436 = vector.extract_strided_slice %58 {offsets = [80, 0], sizes = [16, 16], strides = [1, 1]} : vector<128x16xf32> to vector<16x16xf32>
    %437 = vector.shape_cast %436 : vector<16x16xf32> to vector<1x16x16xf32>
    %438 = vector.broadcast %437 : vector<1x16x16xf32> to vector<8x16x16xf32>
    %439 = arith.mulf %438, %75 : vector<8x16x16xf32>
    %cst_148 = arith.constant dense<0.000000e+00> : vector<8x16xf32>
    %440 = vector.multi_reduction <add>, %439, %cst_148 [1] : vector<8x16x16xf32> to vector<8x16xf32>
    %441 = vector.extract_strided_slice %119 {offsets = [5, 0], sizes = [1, 16], strides = [1, 1]} : vector<8x16xf32> to vector<1x16xf32>
    %442 = vector.broadcast %441 : vector<1x16xf32> to vector<8x16xf32>
    %443 = arith.addf %442, %77 : vector<8x16xf32>
    %cst_149 = arith.constant 2.000000e+00 : f32
    %444 = vector.broadcast %cst_149 : f32 to vector<8x16xf32>
    %445 = arith.mulf %444, %440 : vector<8x16xf32>
    %446 = arith.subf %443, %445 : vector<8x16xf32>
    %cst_150 = arith.constant 9.99999996E-13 : f32
    %447 = vector.broadcast %cst_150 : f32 to vector<8x16xf32>
    %448 = arith.maximumf %446, %447 : vector<8x16xf32>
    %449 = math.sqrt %448 : vector<8x16xf32>
    %cst_151 = arith.constant 5.000000e-01 : f32
    %450 = vector.broadcast %cst_151 : f32 to vector<8x16xf32>
    %451 = arith.mulf %450, %449 : vector<8x16xf32>
    %452 = math.tanh %451 : vector<8x16xf32>
    %c1_i32_152 = arith.constant 1 : i32
    %453 = tpu.dynamic_rotate %452 by %c1_i32_152 dim 0 : vector<8x16xf32>, i32 -> vector<8x16xf32>
    %454 = tpu.iota {dimensions = array<i32: 0>} : vector<8x16xi32>
    %c1_i32_153 = arith.constant 1 : i32
    %455 = vector.broadcast %c1_i32_153 : i32 to vector<8x16xi32>
    %456 = arith.cmpi sge, %454, %455 : vector<8x16xi32>
    %cst_154 = arith.constant 0.000000e+00 : f32
    %457 = vector.broadcast %cst_154 : f32 to vector<8x16xf32>
    %458 = arith.select %456, %453, %457 : vector<8x16xi1>, vector<8x16xf32>
    %459 = arith.addf %452, %458 : vector<8x16xf32>
    %c2_i32_155 = arith.constant 2 : i32
    %460 = tpu.dynamic_rotate %459 by %c2_i32_155 dim 0 : vector<8x16xf32>, i32 -> vector<8x16xf32>
    %461 = tpu.iota {dimensions = array<i32: 0>} : vector<8x16xi32>
    %c2_i32_156 = arith.constant 2 : i32
    %462 = vector.broadcast %c2_i32_156 : i32 to vector<8x16xi32>
    %463 = arith.cmpi sge, %461, %462 : vector<8x16xi32>
    %cst_157 = arith.constant 0.000000e+00 : f32
    %464 = vector.broadcast %cst_157 : f32 to vector<8x16xf32>
    %465 = arith.select %463, %460, %464 : vector<8x16xi1>, vector<8x16xf32>
    %466 = arith.addf %459, %465 : vector<8x16xf32>
    %c4_i32_158 = arith.constant 4 : i32
    %467 = tpu.dynamic_rotate %466 by %c4_i32_158 dim 0 : vector<8x16xf32>, i32 -> vector<8x16xf32>
    %468 = tpu.iota {dimensions = array<i32: 0>} : vector<8x16xi32>
    %c4_i32_159 = arith.constant 4 : i32
    %469 = vector.broadcast %c4_i32_159 : i32 to vector<8x16xi32>
    %470 = arith.cmpi sge, %468, %469 : vector<8x16xi32>
    %cst_160 = arith.constant 0.000000e+00 : f32
    %471 = vector.broadcast %cst_160 : f32 to vector<8x16xf32>
    %472 = arith.select %470, %467, %471 : vector<8x16xi1>, vector<8x16xf32>
    %473 = arith.addf %466, %472 : vector<8x16xf32>
    %474 = arith.subf %435, %473 : vector<8x16xf32>
    %475 = arith.addf %474, %452 : vector<8x16xf32>
    %c1_i32_161 = arith.constant 1 : i32
    %476 = tpu.dynamic_rotate %475 by %c1_i32_161 dim 0 : vector<8x16xf32>, i32 -> vector<8x16xf32>
    %477 = tpu.iota {dimensions = array<i32: 0>} : vector<8x16xi32>
    %c1_i32_162 = arith.constant 1 : i32
    %478 = vector.broadcast %c1_i32_162 : i32 to vector<8x16xi32>
    %479 = arith.cmpi sge, %477, %478 : vector<8x16xi32>
    %cst_163 = arith.constant 1.000000e+30 : f32
    %480 = vector.broadcast %cst_163 : f32 to vector<8x16xf32>
    %481 = arith.select %479, %476, %480 : vector<8x16xi1>, vector<8x16xf32>
    %482 = arith.minimumf %475, %481 : vector<8x16xf32>
    %c2_i32_164 = arith.constant 2 : i32
    %483 = tpu.dynamic_rotate %482 by %c2_i32_164 dim 0 : vector<8x16xf32>, i32 -> vector<8x16xf32>
    %484 = tpu.iota {dimensions = array<i32: 0>} : vector<8x16xi32>
    %c2_i32_165 = arith.constant 2 : i32
    %485 = vector.broadcast %c2_i32_165 : i32 to vector<8x16xi32>
    %486 = arith.cmpi sge, %484, %485 : vector<8x16xi32>
    %cst_166 = arith.constant 1.000000e+30 : f32
    %487 = vector.broadcast %cst_166 : f32 to vector<8x16xf32>
    %488 = arith.select %486, %483, %487 : vector<8x16xi1>, vector<8x16xf32>
    %489 = arith.minimumf %482, %488 : vector<8x16xf32>
    %c4_i32_167 = arith.constant 4 : i32
    %490 = tpu.dynamic_rotate %489 by %c4_i32_167 dim 0 : vector<8x16xf32>, i32 -> vector<8x16xf32>
    %491 = tpu.iota {dimensions = array<i32: 0>} : vector<8x16xi32>
    %c4_i32_168 = arith.constant 4 : i32
    %492 = vector.broadcast %c4_i32_168 : i32 to vector<8x16xi32>
    %493 = arith.cmpi sge, %491, %492 : vector<8x16xi32>
    %cst_169 = arith.constant 1.000000e+30 : f32
    %494 = vector.broadcast %cst_169 : f32 to vector<8x16xf32>
    %495 = arith.select %493, %490, %494 : vector<8x16xi1>, vector<8x16xf32>
    %496 = arith.minimumf %489, %495 : vector<8x16xf32>
    %497 = arith.addf %473, %496 : vector<8x16xf32>
    %498 = vector.extract_strided_slice %58 {offsets = [96, 0], sizes = [16, 16], strides = [1, 1]} : vector<128x16xf32> to vector<16x16xf32>
    %499 = vector.shape_cast %498 : vector<16x16xf32> to vector<1x16x16xf32>
    %500 = vector.broadcast %499 : vector<1x16x16xf32> to vector<8x16x16xf32>
    %501 = arith.mulf %500, %75 : vector<8x16x16xf32>
    %cst_170 = arith.constant dense<0.000000e+00> : vector<8x16xf32>
    %502 = vector.multi_reduction <add>, %501, %cst_170 [1] : vector<8x16x16xf32> to vector<8x16xf32>
    %503 = vector.extract_strided_slice %119 {offsets = [6, 0], sizes = [1, 16], strides = [1, 1]} : vector<8x16xf32> to vector<1x16xf32>
    %504 = vector.broadcast %503 : vector<1x16xf32> to vector<8x16xf32>
    %505 = arith.addf %504, %77 : vector<8x16xf32>
    %cst_171 = arith.constant 2.000000e+00 : f32
    %506 = vector.broadcast %cst_171 : f32 to vector<8x16xf32>
    %507 = arith.mulf %506, %502 : vector<8x16xf32>
    %508 = arith.subf %505, %507 : vector<8x16xf32>
    %cst_172 = arith.constant 9.99999996E-13 : f32
    %509 = vector.broadcast %cst_172 : f32 to vector<8x16xf32>
    %510 = arith.maximumf %508, %509 : vector<8x16xf32>
    %511 = math.sqrt %510 : vector<8x16xf32>
    %cst_173 = arith.constant 5.000000e-01 : f32
    %512 = vector.broadcast %cst_173 : f32 to vector<8x16xf32>
    %513 = arith.mulf %512, %511 : vector<8x16xf32>
    %514 = math.tanh %513 : vector<8x16xf32>
    %c1_i32_174 = arith.constant 1 : i32
    %515 = tpu.dynamic_rotate %514 by %c1_i32_174 dim 0 : vector<8x16xf32>, i32 -> vector<8x16xf32>
    %516 = tpu.iota {dimensions = array<i32: 0>} : vector<8x16xi32>
    %c1_i32_175 = arith.constant 1 : i32
    %517 = vector.broadcast %c1_i32_175 : i32 to vector<8x16xi32>
    %518 = arith.cmpi sge, %516, %517 : vector<8x16xi32>
    %cst_176 = arith.constant 0.000000e+00 : f32
    %519 = vector.broadcast %cst_176 : f32 to vector<8x16xf32>
    %520 = arith.select %518, %515, %519 : vector<8x16xi1>, vector<8x16xf32>
    %521 = arith.addf %514, %520 : vector<8x16xf32>
    %c2_i32_177 = arith.constant 2 : i32
    %522 = tpu.dynamic_rotate %521 by %c2_i32_177 dim 0 : vector<8x16xf32>, i32 -> vector<8x16xf32>
    %523 = tpu.iota {dimensions = array<i32: 0>} : vector<8x16xi32>
    %c2_i32_178 = arith.constant 2 : i32
    %524 = vector.broadcast %c2_i32_178 : i32 to vector<8x16xi32>
    %525 = arith.cmpi sge, %523, %524 : vector<8x16xi32>
    %cst_179 = arith.constant 0.000000e+00 : f32
    %526 = vector.broadcast %cst_179 : f32 to vector<8x16xf32>
    %527 = arith.select %525, %522, %526 : vector<8x16xi1>, vector<8x16xf32>
    %528 = arith.addf %521, %527 : vector<8x16xf32>
    %c4_i32_180 = arith.constant 4 : i32
    %529 = tpu.dynamic_rotate %528 by %c4_i32_180 dim 0 : vector<8x16xf32>, i32 -> vector<8x16xf32>
    %530 = tpu.iota {dimensions = array<i32: 0>} : vector<8x16xi32>
    %c4_i32_181 = arith.constant 4 : i32
    %531 = vector.broadcast %c4_i32_181 : i32 to vector<8x16xi32>
    %532 = arith.cmpi sge, %530, %531 : vector<8x16xi32>
    %cst_182 = arith.constant 0.000000e+00 : f32
    %533 = vector.broadcast %cst_182 : f32 to vector<8x16xf32>
    %534 = arith.select %532, %529, %533 : vector<8x16xi1>, vector<8x16xf32>
    %535 = arith.addf %528, %534 : vector<8x16xf32>
    %536 = arith.subf %497, %535 : vector<8x16xf32>
    %537 = arith.addf %536, %514 : vector<8x16xf32>
    %c1_i32_183 = arith.constant 1 : i32
    %538 = tpu.dynamic_rotate %537 by %c1_i32_183 dim 0 : vector<8x16xf32>, i32 -> vector<8x16xf32>
    %539 = tpu.iota {dimensions = array<i32: 0>} : vector<8x16xi32>
    %c1_i32_184 = arith.constant 1 : i32
    %540 = vector.broadcast %c1_i32_184 : i32 to vector<8x16xi32>
    %541 = arith.cmpi sge, %539, %540 : vector<8x16xi32>
    %cst_185 = arith.constant 1.000000e+30 : f32
    %542 = vector.broadcast %cst_185 : f32 to vector<8x16xf32>
    %543 = arith.select %541, %538, %542 : vector<8x16xi1>, vector<8x16xf32>
    %544 = arith.minimumf %537, %543 : vector<8x16xf32>
    %c2_i32_186 = arith.constant 2 : i32
    %545 = tpu.dynamic_rotate %544 by %c2_i32_186 dim 0 : vector<8x16xf32>, i32 -> vector<8x16xf32>
    %546 = tpu.iota {dimensions = array<i32: 0>} : vector<8x16xi32>
    %c2_i32_187 = arith.constant 2 : i32
    %547 = vector.broadcast %c2_i32_187 : i32 to vector<8x16xi32>
    %548 = arith.cmpi sge, %546, %547 : vector<8x16xi32>
    %cst_188 = arith.constant 1.000000e+30 : f32
    %549 = vector.broadcast %cst_188 : f32 to vector<8x16xf32>
    %550 = arith.select %548, %545, %549 : vector<8x16xi1>, vector<8x16xf32>
    %551 = arith.minimumf %544, %550 : vector<8x16xf32>
    %c4_i32_189 = arith.constant 4 : i32
    %552 = tpu.dynamic_rotate %551 by %c4_i32_189 dim 0 : vector<8x16xf32>, i32 -> vector<8x16xf32>
    %553 = tpu.iota {dimensions = array<i32: 0>} : vector<8x16xi32>
    %c4_i32_190 = arith.constant 4 : i32
    %554 = vector.broadcast %c4_i32_190 : i32 to vector<8x16xi32>
    %555 = arith.cmpi sge, %553, %554 : vector<8x16xi32>
    %cst_191 = arith.constant 1.000000e+30 : f32
    %556 = vector.broadcast %cst_191 : f32 to vector<8x16xf32>
    %557 = arith.select %555, %552, %556 : vector<8x16xi1>, vector<8x16xf32>
    %558 = arith.minimumf %551, %557 : vector<8x16xf32>
    %559 = arith.addf %535, %558 : vector<8x16xf32>
    %560 = vector.extract_strided_slice %58 {offsets = [112, 0], sizes = [16, 16], strides = [1, 1]} : vector<128x16xf32> to vector<16x16xf32>
    %561 = vector.shape_cast %560 : vector<16x16xf32> to vector<1x16x16xf32>
    %562 = vector.broadcast %561 : vector<1x16x16xf32> to vector<8x16x16xf32>
    %563 = arith.mulf %562, %75 : vector<8x16x16xf32>
    %cst_192 = arith.constant dense<0.000000e+00> : vector<8x16xf32>
    %564 = vector.multi_reduction <add>, %563, %cst_192 [1] : vector<8x16x16xf32> to vector<8x16xf32>
    %565 = vector.extract_strided_slice %119 {offsets = [7, 0], sizes = [1, 16], strides = [1, 1]} : vector<8x16xf32> to vector<1x16xf32>
    %566 = vector.broadcast %565 : vector<1x16xf32> to vector<8x16xf32>
    %567 = arith.addf %566, %77 : vector<8x16xf32>
    %cst_193 = arith.constant 2.000000e+00 : f32
    %568 = vector.broadcast %cst_193 : f32 to vector<8x16xf32>
    %569 = arith.mulf %568, %564 : vector<8x16xf32>
    %570 = arith.subf %567, %569 : vector<8x16xf32>
    %cst_194 = arith.constant 9.99999996E-13 : f32
    %571 = vector.broadcast %cst_194 : f32 to vector<8x16xf32>
    %572 = arith.maximumf %570, %571 : vector<8x16xf32>
    %573 = math.sqrt %572 : vector<8x16xf32>
    %cst_195 = arith.constant 5.000000e-01 : f32
    %574 = vector.broadcast %cst_195 : f32 to vector<8x16xf32>
    %575 = arith.mulf %574, %573 : vector<8x16xf32>
    %576 = math.tanh %575 : vector<8x16xf32>
    %c1_i32_196 = arith.constant 1 : i32
    %577 = tpu.dynamic_rotate %576 by %c1_i32_196 dim 0 : vector<8x16xf32>, i32 -> vector<8x16xf32>
    %578 = tpu.iota {dimensions = array<i32: 0>} : vector<8x16xi32>
    %c1_i32_197 = arith.constant 1 : i32
    %579 = vector.broadcast %c1_i32_197 : i32 to vector<8x16xi32>
    %580 = arith.cmpi sge, %578, %579 : vector<8x16xi32>
    %cst_198 = arith.constant 0.000000e+00 : f32
    %581 = vector.broadcast %cst_198 : f32 to vector<8x16xf32>
    %582 = arith.select %580, %577, %581 : vector<8x16xi1>, vector<8x16xf32>
    %583 = arith.addf %576, %582 : vector<8x16xf32>
    %c2_i32_199 = arith.constant 2 : i32
    %584 = tpu.dynamic_rotate %583 by %c2_i32_199 dim 0 : vector<8x16xf32>, i32 -> vector<8x16xf32>
    %585 = tpu.iota {dimensions = array<i32: 0>} : vector<8x16xi32>
    %c2_i32_200 = arith.constant 2 : i32
    %586 = vector.broadcast %c2_i32_200 : i32 to vector<8x16xi32>
    %587 = arith.cmpi sge, %585, %586 : vector<8x16xi32>
    %cst_201 = arith.constant 0.000000e+00 : f32
    %588 = vector.broadcast %cst_201 : f32 to vector<8x16xf32>
    %589 = arith.select %587, %584, %588 : vector<8x16xi1>, vector<8x16xf32>
    %590 = arith.addf %583, %589 : vector<8x16xf32>
    %c4_i32_202 = arith.constant 4 : i32
    %591 = tpu.dynamic_rotate %590 by %c4_i32_202 dim 0 : vector<8x16xf32>, i32 -> vector<8x16xf32>
    %592 = tpu.iota {dimensions = array<i32: 0>} : vector<8x16xi32>
    %c4_i32_203 = arith.constant 4 : i32
    %593 = vector.broadcast %c4_i32_203 : i32 to vector<8x16xi32>
    %594 = arith.cmpi sge, %592, %593 : vector<8x16xi32>
    %cst_204 = arith.constant 0.000000e+00 : f32
    %595 = vector.broadcast %cst_204 : f32 to vector<8x16xf32>
    %596 = arith.select %594, %591, %595 : vector<8x16xi1>, vector<8x16xf32>
    %597 = arith.addf %590, %596 : vector<8x16xf32>
    %598 = arith.subf %559, %597 : vector<8x16xf32>
    %599 = arith.addf %598, %576 : vector<8x16xf32>
    %c1_i32_205 = arith.constant 1 : i32
    %600 = tpu.dynamic_rotate %599 by %c1_i32_205 dim 0 : vector<8x16xf32>, i32 -> vector<8x16xf32>
    %601 = tpu.iota {dimensions = array<i32: 0>} : vector<8x16xi32>
    %c1_i32_206 = arith.constant 1 : i32
    %602 = vector.broadcast %c1_i32_206 : i32 to vector<8x16xi32>
    %603 = arith.cmpi sge, %601, %602 : vector<8x16xi32>
    %cst_207 = arith.constant 1.000000e+30 : f32
    %604 = vector.broadcast %cst_207 : f32 to vector<8x16xf32>
    %605 = arith.select %603, %600, %604 : vector<8x16xi1>, vector<8x16xf32>
    %606 = arith.minimumf %599, %605 : vector<8x16xf32>
    %c2_i32_208 = arith.constant 2 : i32
    %607 = tpu.dynamic_rotate %606 by %c2_i32_208 dim 0 : vector<8x16xf32>, i32 -> vector<8x16xf32>
    %608 = tpu.iota {dimensions = array<i32: 0>} : vector<8x16xi32>
    %c2_i32_209 = arith.constant 2 : i32
    %609 = vector.broadcast %c2_i32_209 : i32 to vector<8x16xi32>
    %610 = arith.cmpi sge, %608, %609 : vector<8x16xi32>
    %cst_210 = arith.constant 1.000000e+30 : f32
    %611 = vector.broadcast %cst_210 : f32 to vector<8x16xf32>
    %612 = arith.select %610, %607, %611 : vector<8x16xi1>, vector<8x16xf32>
    %613 = arith.minimumf %606, %612 : vector<8x16xf32>
    %c4_i32_211 = arith.constant 4 : i32
    %614 = tpu.dynamic_rotate %613 by %c4_i32_211 dim 0 : vector<8x16xf32>, i32 -> vector<8x16xf32>
    %615 = tpu.iota {dimensions = array<i32: 0>} : vector<8x16xi32>
    %c4_i32_212 = arith.constant 4 : i32
    %616 = vector.broadcast %c4_i32_212 : i32 to vector<8x16xi32>
    %617 = arith.cmpi sge, %615, %616 : vector<8x16xi32>
    %cst_213 = arith.constant 1.000000e+30 : f32
    %618 = vector.broadcast %cst_213 : f32 to vector<8x16xf32>
    %619 = arith.select %617, %614, %618 : vector<8x16xi1>, vector<8x16xf32>
    %620 = arith.minimumf %613, %619 : vector<8x16xf32>
    %621 = arith.addf %597, %620 : vector<8x16xf32>
    %622 = vector.extract_strided_slice %621 {offsets = [7, 0], sizes = [1, 16], strides = [1, 1]} : vector<8x16xf32> to vector<1x16xf32>
    %623 = vector.extract_strided_slice %622 {offsets = [0, 0], sizes = [1, 8], strides = [1, 1]} : vector<1x16xf32> to vector<1x8xf32>
    %624 = vector.extract_strided_slice %622 {offsets = [0, 8], sizes = [1, 8], strides = [1, 1]} : vector<1x16xf32> to vector<1x8xf32>
    %625 = arith.subf %31, %33 : vector<1x8xf32>
    %cst_214 = arith.constant 3.000000e-01 : f32
    %626 = vector.broadcast %cst_214 : f32 to vector<1x8xf32>
    %627 = arith.addf %625, %626 : vector<1x8xf32>
    %cst_215 = arith.constant 0.000000e+00 : f32
    %628 = vector.broadcast %cst_215 : f32 to vector<1x8xf32>
    %629 = arith.maximumf %627, %628 : vector<1x8xf32>
    %630 = arith.subf %623, %624 : vector<1x8xf32>
    %cst_216 = arith.constant 3.000000e-01 : f32
    %631 = vector.broadcast %cst_216 : f32 to vector<1x8xf32>
    %632 = arith.addf %630, %631 : vector<1x8xf32>
    %cst_217 = arith.constant 0.000000e+00 : f32
    %633 = vector.broadcast %cst_217 : f32 to vector<1x8xf32>
    %634 = arith.maximumf %632, %633 : vector<1x8xf32>
    %cst_218 = arith.constant dense<0.000000e+00> : vector<1xf32>
    %635 = vector.multi_reduction <add>, %629, %cst_218 [1] : vector<1x8xf32> to vector<1xf32>
    %636 = vector.shape_cast %635 : vector<1xf32> to vector<1x1xf32>
    %637 = vector.shape_cast %636 : vector<1x1xf32> to vector<1x1x1xf32>
    %c0_219 = arith.constant 0 : index
    %c0_220 = arith.constant 0 : index
    %c0_221 = arith.constant 0 : index
    %638 = vector.load %arg7[%c0_219, %c0_220, %c0_221] : memref<1x1x1xf32, #tpu.memory_space<vmem>>, vector<1x1x1xf32>
    tpu.vector_store %arg7[%c0_219, %c0_220, %c0_221], %637 {strides = array<i32>} : memref<1x1x1xf32, #tpu.memory_space<vmem>>, vector<1x1x1xf32>,
    %cst_222 = arith.constant dense<0.000000e+00> : vector<1xf32>
    %639 = vector.multi_reduction <add>, %634, %cst_222 [1] : vector<1x8xf32> to vector<1xf32>
    %640 = vector.shape_cast %639 : vector<1xf32> to vector<1x1xf32>
    %641 = vector.shape_cast %640 : vector<1x1xf32> to vector<1x1x1xf32>
    %c0_223 = arith.constant 0 : index
    %c0_224 = arith.constant 0 : index
    %c0_225 = arith.constant 0 : index
    %642 = vector.load %arg8[%c0_223, %c0_224, %c0_225] : memref<1x1x1xf32, #tpu.memory_space<vmem>>, vector<1x1x1xf32>
    tpu.vector_store %arg8[%c0_223, %c0_224, %c0_225], %641 {strides = array<i32>} : memref<1x1x1xf32, #tpu.memory_space<vmem>>, vector<1x1x1xf32>,
    return
  }
  func.func @transform_0(%arg0: i32) -> (i32, i32) {
    %c0_i32 = arith.constant 0 : i32
    %c0_i32_0 = arith.constant 0 : i32
    %c0_i32_1 = arith.constant 0 : i32
    return %c0_i32, %c0_i32_0 : i32, i32
  }
  func.func @transform_1(%arg0: i32) -> (i32, i32) {
    %c0_i32 = arith.constant 0 : i32
    %c0_i32_0 = arith.constant 0 : i32
    return %c0_i32, %arg0 : i32, i32
  }
  func.func @transform_2(%arg0: i32) -> (i32, i32) {
    %c0_i32 = arith.constant 0 : i32
    %c0_i32_0 = arith.constant 0 : i32
    %c0_i32_1 = arith.constant 0 : i32
    return %c0_i32, %c0_i32_0 : i32, i32
  }
  func.func @transform_3(%arg0: i32) -> (i32, i32) {
    %c0_i32 = arith.constant 0 : i32
    %c0_i32_0 = arith.constant 0 : i32
    return %arg0, %c0_i32 : i32, i32
  }
  func.func @transform_4(%arg0: i32) -> (i32, i32) {
    %c0_i32 = arith.constant 0 : i32
    %c0_i32_0 = arith.constant 0 : i32
    %c0_i32_1 = arith.constant 0 : i32
    return %c0_i32, %c0_i32_0 : i32, i32
  }
  func.func @transform_5(%arg0: i32) -> (i32, i32) {
    %c0_i32 = arith.constant 0 : i32
    %c0_i32_0 = arith.constant 0 : i32
    return %c0_i32, %arg0 : i32, i32
  }
  func.func @transform_6(%arg0: i32) -> (i32, i32, i32) {
    %c0_i32 = arith.constant 0 : i32
    %c0_i32_0 = arith.constant 0 : i32
    %c0_i32_1 = arith.constant 0 : i32
    return %arg0, %c0_i32, %c0_i32_0 : i32, i32, i32
  }
  func.func @transform_7(%arg0: i32) -> (i32, i32, i32) {
    %c0_i32 = arith.constant 0 : i32
    %c0_i32_0 = arith.constant 0 : i32
    %c0_i32_1 = arith.constant 0 : i32
    return %arg0, %c0_i32, %c0_i32_0 : i32, i32, i32
  }
}

</mosaic_0001>

<llo_original>
// kernel: triplet_aligned_reid_loss.1
$region0: #{triplet_aligned_reid_loss.1}
  #allocation0 [shape = 'u32[]', space=smem, size = 0x4, offset = 0x4, fixed_abs, tag = 'smem constant byte address 0x4 - core index']
  #allocation1 [shape = 'u32[72,128]{1,0:T(1,128)}', space=vmem, size = 0x9000, scoped, tag = 'internal scratch']
  %s0 = inlined_call_operand.vmem [shape: s32[8,1], index: 0, kind: input, shape index: {}]
  %s1 = inlined_call_operand.vmem [shape: s32[1,8], index: 1, kind: input, shape index: {}]
  %s2 = inlined_call_operand.vmem [shape: f32[8,32], index: 2, kind: input, shape index: {}, may-alias: {2,3}]
  %s3 = inlined_call_operand.vmem [shape: f32[8,32], index: 3, kind: input, shape index: {}, may-alias: {2,3}]
  %s4 = inlined_call_operand.vmem [shape: f32[128,8], index: 4, kind: input, shape index: {}, may-alias: {4,5}]
  %s5 = inlined_call_operand.vmem [shape: f32[128,8], index: 5, kind: input, shape index: {}, may-alias: {4,5}]
  %s6 = inlined_call_operand.hbm [shape: f32[1,1,1], index: 6, kind: output, shape index: {0}]
  %s7 = inlined_call_operand.hbm [shape: f32[1,1,1], index: 7, kind: output, shape index: {1}]
  %8 = xla_tuple %s6, %s7
  %s9 = sld [smem:[#allocation0]]
  $region42: #{triplet_aligned_reid_loss.1} parent=0
    _
  %s11 = ssub.s32 1, %s9
  %s12 = scalar_select 0, %s11, %s9
  $region1: #{triplet_aligned_reid_loss.1} parent=0
    #allocation2 [shape = 'u8[512]{0}', space=vmem, size = 0x400, scoped, tag = 'output window, operand 0, single buffered']
    #allocation3 [shape = 's32[1]{0}', space=sflag, size = 0x4, scoped, tag = 'scoped memory for triplet_aligned_reid_loss.1']
    #allocation4 [shape = 'u8[512]{0}', space=vmem, size = 0x400, scoped, tag = 'output window, operand 1, single buffered']
    #allocation5 [shape = 's32[1]{0}', space=sflag, size = 0x4, scoped, tag = 'scoped memory for triplet_aligned_reid_loss.1']
    %13 = vsyncpa [#allocation3], 0
    %14 = vsyncpa [#allocation5], 0
    // Predicated region
    $region2: #{triplet_aligned_reid_loss.1} parent=1 // pred_check
      _
    $region3: #{triplet_aligned_reid_loss.1} parent=1 // pred_check_branch
      %16 = sbr.rel (0) target = $region5
    $region4: #{triplet_aligned_reid_loss.1} parent=1 // pred_region
      _
    $region5: #{triplet_aligned_reid_loss.1} parent=1 // pred_fallthru
      _
    // Predicated region
    $region6: #{triplet_aligned_reid_loss.1} parent=1 // pred_check
      _
    $region7: #{triplet_aligned_reid_loss.1} parent=1 // pred_check_branch
      %18 = sbr.rel (0) target = $region9
    $region8: #{triplet_aligned_reid_loss.1} parent=1 // pred_region
      _
    $region9: #{triplet_aligned_reid_loss.1} parent=1 // pred_fallthru
      _
    // Predicated region
    $region10: #{triplet_aligned_reid_loss.1} parent=1 // pred_check
      _
    $region11: #{triplet_aligned_reid_loss.1} parent=1 // pred_check_branch
      %20 = sbr.rel (0) target = $region13
    $region12: #{triplet_aligned_reid_loss.1} parent=1 // pred_region
      _
    $region13: #{triplet_aligned_reid_loss.1} parent=1 // pred_fallthru
      _
    // Predicated region
    $region14: #{triplet_aligned_reid_loss.1} parent=1 // pred_check
      _
    $region15: #{triplet_aligned_reid_loss.1} parent=1 // pred_check_branch
      %22 = sbr.rel (0) target = $region17
    $region16: #{triplet_aligned_reid_loss.1} parent=1 // pred_region
      _
    $region17: #{triplet_aligned_reid_loss.1} parent=1 // pred_fallthru
      _
    // Predicated region
    $region18: #{triplet_aligned_reid_loss.1} parent=1 // pred_check
      _
    $region19: #{triplet_aligned_reid_loss.1} parent=1 // pred_check_branch
      %24 = sbr.rel (0) target = $region21
    $region20: #{triplet_aligned_reid_loss.1} parent=1 // pred_region
      _
    $region21: #{triplet_aligned_reid_loss.1} parent=1 // pred_fallthru
      _
    // Predicated region
    $region22: #{triplet_aligned_reid_loss.1} parent=1 // pred_check
      _
    $region23: #{triplet_aligned_reid_loss.1} parent=1 // pred_check_branch
      %26 = sbr.rel (0) target = $region25
    $region24: #{triplet_aligned_reid_loss.1} parent=1 // pred_region
      _
    $region25: #{triplet_aligned_reid_loss.1} parent=1 // pred_fallthru
      _
    %v27 = vld [vmem:[%s2] sm:$0xff]
    %v28 = vld [vmem:[%s3] sm:$0xff]
    %v29 = vmul.f32 %v27, %v27
    %vm30 = vcmask 261120
    %v31 = vsel %vm30, %v29, 0.0
    %32 = vadd.xlane.f32.xlu0 %v31
    %v33 = vpop.xlane.xlu0 %32
    %v34 = vmul.f32 %v28, %v28
    %v36 = vsel %vm30, 1.0, 0
    %v39 = vsel %vm30, %v34, 0
    %41 = vmatpush.xpose.msra.mxu0 0.0
    %42 = vmatpush.xpose.msra.mxu0 0.0
    %43 = vmatpush.xpose.msra.mxu0 0.0
    %44 = vmatpush.xpose.msra.mxu0 0.0
    %45 = vmatpush.xpose.msra.mxu0 0.0
    %46 = vmatpush.xpose.msra.mxu0 0.0
    %47 = vmatpush.xpose.msra.mxu0 0.0
    %48 = vmatpush.xpose.msra.mxu0 0.0
    %49 = vmatpush.xpose.msra.mxu0 0.0
    %50 = vmatpush.xpose.msra.mxu0 0.0
    %51 = vmatpush.xpose.msra.mxu0 0.0
    %52 = vmatpush.xpose.msra.mxu0 0.0
    %53 = vmatpush.xpose.msra.mxu0 0.0
    %54 = vmatpush.xpose.msra.mxu0 0.0
    %55 = vmatpush.xpose.msra.mxu0 0.0
    %56 = vmatpush.xpose.msra.mxu0 %v39
    %57 = vmatmul.f32.gmra.mxu0 %v36
    %v58 = vpop.f32.mrf.mxu0
    %v59 = vadd.f32 0.0, %v58
    %60 = vdwg.mxu0
    %v62 = vsel %vm30, %v27, 0
    %v65 = vsel %vm30, %v28, 0
    %67 = vmatpush.xpose.msra.mxu0 0.0
    %68 = vmatpush.xpose.msra.mxu0 0.0
    %69 = vmatpush.xpose.msra.mxu0 0.0
    %70 = vmatpush.xpose.msra.mxu0 0.0
    %71 = vmatpush.xpose.msra.mxu0 0.0
    %72 = vmatpush.xpose.msra.mxu0 0.0
    %73 = vmatpush.xpose.msra.mxu0 0.0
    %74 = vmatpush.xpose.msra.mxu0 0.0
    %75 = vmatpush.xpose.msra.mxu0 0.0
    %76 = vmatpush.xpose.msra.mxu0 0.0
    %77 = vmatpush.xpose.msra.mxu0 0.0
    %78 = vmatpush.xpose.msra.mxu0 0.0
    %79 = vmatpush.xpose.msra.mxu0 0.0
    %80 = vmatpush.xpose.msra.mxu0 0.0
    %81 = vmatpush.xpose.msra.mxu0 0.0
    %82 = vmatpush.xpose.msra.mxu0 %v65
    %83 = vmatmul.f32.gmra.mxu0 %v62
    %v84 = vpop.f32.mrf.mxu0
    %v85 = vadd.f32 0.0, %v84
    %86 = vdwg.mxu0
    %v87 = vperm.slane %v59, 0
    %v88 = vadd.f32 %v33, %v87
    %v89 = vmul.f32 %v85, 2.0
    %v90 = vsub.f32 %v88, %v89
    %v91 = vmax.f32 %v90, 1e-12
    %v92 = vrsqrt.pop %v91
    %v93 = vmul.f32 %v92, %v91
    %v94 = vmul.f32 %v93, %v92
    %v95 = vmul.f32 0.5, %v94
    %v96 = vsub.f32 1.5, %v95
    %v97 = vmul.f32 %v92, %v96
    %v98 = vmul.f32 %v91, %v97
    %vm99 = vcmp.eq.f32.partialorder %v91, inf
    %v100 = vsel %vm99, %v91, %v98
    %vm101 = vcmp.eq.f32.partialorder %v91, 0.0
    %v102 = vand.u32 %v91, 2147483648
    %v103 = vsel %vm101, %v102, %v100
    %v104 = vld [vmem:[%s0] sm:$0xff]
    %v105 = vld [vmem:[%s1] sm:$0x1]
    %106 = vset.pattern.permute.xlu0 0
    %107 = vperm.xlu0 %106, %v104
    %v108 = vpop.permute.xlu0 %107
    %v109 = vperm.slane %v105, 0
    %vm110 = vcmp.eq.s32.totalorder %v108, %v109
    %v111 = vsel %vm110, %v103, -1e+30
    %v112 = vsel %vm110, 1e+30, %v103
    %vm113 = vcmask 64512
    %v114 = vsel %vm113, %v111, -inf
    %v115 = vrot.slane %v114, 4
    %v116 = vmax.f32 %v114, %v115
    %v117 = vrot.slane %v116, 2
    %v118 = vmax.f32 %v116, %v117
    %v119 = vrot.slane %v118, 1
    %v120 = vmax.f32 %v118, %v119
    %v121 = vsel %vm113, %v112, inf
    %v122 = vrot.slane %v121, 4
    %v123 = vmin.f32 %v121, %v122
    %v124 = vrot.slane %v123, 2
    %v125 = vmin.f32 %v123, %v124
    %v126 = vrot.slane %v125, 1
    %v127 = vmin.f32 %v125, %v126
    %v128 = vlaneseq
    %v129 = vshrl.u32 %v128, 7
    %v130 = vcvt.s32.f32 %v129
    %vm131 = vcmp.eq.f32.partialorder %v111, %v120
    %v132 = vsel %vm131, %v130, 8.0
    %v133 = vsel %vm113, %v132, inf
    %v134 = vrot.slane %v133, 4
    %v135 = vmin.f32 %v133, %v134
    %v136 = vrot.slane %v135, 2
    %v137 = vmin.f32 %v135, %v136
    %v138 = vrot.slane %v137, 1
    %v139 = vmin.f32 %v137, %v138
    %vm140 = vcmp.eq.f32.partialorder %v112, %v127
    %v141 = vsel %vm140, %v130, 8.0
    %v142 = vsel %vm113, %v141, inf
    %v143 = vrot.slane %v142, 4
    %v144 = vmin.f32 %v142, %v143
    %v145 = vrot.slane %v144, 2
    %v146 = vmin.f32 %v144, %v145
    %v147 = vrot.slane %v146, 1
    %v148 = vmin.f32 %v146, %v147
    %150 = vrot.lane.b32.xlu0 %v148, 8
    %v151 = vpop.permute.xlu0 %150
    %v153 = vsel %vm113, %v139, %v151
    %v154 = vperm.slane %v153, 0
    %vm155 = vcmp.eq.f32.partialorder %v130, %v154
    %v156 = vsel %vm155, 1, 0
    %v157 = vcvt.s32.f32 %v156
    %v158 = vld [vmem:[%s4] sm:$0xff]
    %v159 = vld [vmem:[%s4 + $0x8] sm:$0xff]
    %v160 = vld [vmem:[%s4 + $0x10] sm:$0xff]
    %v161 = vld [vmem:[%s4 + $0x18] sm:$0xff]
    %v162 = vld [vmem:[%s4 + $0x20] sm:$0xff]
    %v163 = vld [vmem:[%s4 + $0x28] sm:$0xff]
    %v164 = vld [vmem:[%s4 + $0x30] sm:$0xff]
    %v165 = vld [vmem:[%s4 + $0x38] sm:$0xff]
    %v166 = vld [vmem:[%s4 + $0x40] sm:$0xff]
    %v167 = vld [vmem:[%s4 + $0x48] sm:$0xff]
    %v168 = vld [vmem:[%s4 + $0x50] sm:$0xff]
    %v169 = vld [vmem:[%s4 + $0x58] sm:$0xff]
    %v170 = vld [vmem:[%s4 + $0x60] sm:$0xff]
    %v171 = vld [vmem:[%s4 + $0x68] sm:$0xff]
    %v172 = vld [vmem:[%s4 + $0x70] sm:$0xff]
    %v173 = vld [vmem:[%s4 + $0x78] sm:$0xff]
    %v175 = vsel %vm113, %v158, 0
    %v178 = vsel %vm113, %v159, 0
    %v181 = vsel %vm113, %v160, 0
    %v184 = vsel %vm113, %v161, 0
    %v187 = vsel %vm113, %v162, 0
    %v190 = vsel %vm113, %v163, 0
    %v193 = vsel %vm113, %v164, 0
    %v196 = vsel %vm113, %v165, 0
    %v199 = vsel %vm113, %v166, 0
    %v202 = vsel %vm113, %v167, 0
    %v205 = vsel %vm113, %v168, 0
    %v208 = vsel %vm113, %v169, 0
    %v211 = vsel %vm113, %v170, 0
    %v214 = vsel %vm113, %v171, 0
    %v217 = vsel %vm113, %v172, 0
    %v220 = vsel %vm113, %v173, 0
    %222 = vmatpush.msra.mxu0 0.0
    %223 = vmatpush.msra.mxu0 0.0
    %224 = vmatpush.msra.mxu0 0.0
    %225 = vmatpush.msra.mxu0 0.0
    %226 = vmatpush.msra.mxu0 0.0
    %227 = vmatpush.msra.mxu0 0.0
    %228 = vmatpush.msra.mxu0 0.0
    %229 = vmatpush.msra.mxu0 0.0
    %230 = vmatpush.msra.mxu0 0.0
    %231 = vmatpush.msra.mxu0 0.0
    %232 = vmatpush.msra.mxu0 0.0
    %233 = vmatpush.msra.mxu0 0.0
    %234 = vmatpush.msra.mxu0 0.0
    %235 = vmatpush.msra.mxu0 0.0
    %236 = vmatpush.msra.mxu0 0.0
    %237 = vmatpush.msra.mxu0 %v157
    %238 = vmatmul.f32.gmra.mxu0 %v175
    %v239 = vpop.f32.mrf.mxu0
    %v240 = vadd.f32 0.0, %v239
    %241 = vmatmul.f32.gmra.mxu0 %v178
    %v242 = vpop.f32.mrf.mxu0
    %v243 = vadd.f32 0.0, %v242
    %244 = vmatmul.f32.gmra.mxu0 %v181
    %v245 = vpop.f32.mrf.mxu0
    %v246 = vadd.f32 0.0, %v245
    %247 = vmatmul.f32.gmra.mxu0 %v184
    %v248 = vpop.f32.mrf.mxu0
    %v249 = vadd.f32 0.0, %v248
    %250 = vmatmul.f32.gmra.mxu0 %v187
    %v251 = vpop.f32.mrf.mxu0
    %v252 = vadd.f32 0.0, %v251
    %253 = vmatmul.f32.gmra.mxu0 %v190
    %v254 = vpop.f32.mrf.mxu0
    %v255 = vadd.f32 0.0, %v254
    %256 = vmatmul.f32.gmra.mxu0 %v193
    %v257 = vpop.f32.mrf.mxu0
    %v258 = vadd.f32 0.0, %v257
    %259 = vmatmul.f32.gmra.mxu0 %v196
    %v260 = vpop.f32.mrf.mxu0
    %v261 = vadd.f32 0.0, %v260
    %262 = vmatmul.f32.gmra.mxu0 %v199
    %v263 = vpop.f32.mrf.mxu0
    %v264 = vadd.f32 0.0, %v263
    %265 = vmatmul.f32.gmra.mxu0 %v202
    %v266 = vpop.f32.mrf.mxu0
    %v267 = vadd.f32 0.0, %v266
    %268 = vmatmul.f32.gmra.mxu0 %v205
    %v269 = vpop.f32.mrf.mxu0
    %v270 = vadd.f32 0.0, %v269
    %271 = vmatmul.f32.gmra.mxu0 %v208
    %v272 = vpop.f32.mrf.mxu0
    %v273 = vadd.f32 0.0, %v272
    %274 = vmatmul.f32.gmra.mxu0 %v211
    %v275 = vpop.f32.mrf.mxu0
    %v276 = vadd.f32 0.0, %v275
    %277 = vmatmul.f32.gmra.mxu0 %v214
    %v278 = vpop.f32.mrf.mxu0
    %v279 = vadd.f32 0.0, %v278
    %280 = vmatmul.f32.gmra.mxu0 %v217
    %v281 = vpop.f32.mrf.mxu0
    %v282 = vadd.f32 0.0, %v281
    %283 = vmatmul.f32.gmra.mxu0 %v220
    %v284 = vpop.f32.mrf.mxu0
    %v285 = vadd.f32 0.0, %v284
    %286 = vdwg.mxu0
    %v287 = vld [vmem:[%s5] sm:$0xff]
    %v288 = vld [vmem:[%s5 + $0x8] sm:$0xff]
    %v289 = vld [vmem:[%s5 + $0x10] sm:$0xff]
    %v290 = vld [vmem:[%s5 + $0x18] sm:$0xff]
    %v291 = vld [vmem:[%s5 + $0x20] sm:$0xff]
    %v292 = vld [vmem:[%s5 + $0x28] sm:$0xff]
    %v293 = vld [vmem:[%s5 + $0x30] sm:$0xff]
    %v294 = vld [vmem:[%s5 + $0x38] sm:$0xff]
    %v295 = vld [vmem:[%s5 + $0x40] sm:$0xff]
    %v296 = vld [vmem:[%s5 + $0x48] sm:$0xff]
    %v297 = vld [vmem:[%s5 + $0x50] sm:$0xff]
    %v298 = vld [vmem:[%s5 + $0x58] sm:$0xff]
    %v299 = vld [vmem:[%s5 + $0x60] sm:$0xff]
    %v300 = vld [vmem:[%s5 + $0x68] sm:$0xff]
    %v301 = vld [vmem:[%s5 + $0x70] sm:$0xff]
    %v302 = vld [vmem:[%s5 + $0x78] sm:$0xff]
    %319 = vrot.lane.b32.xlu0 %v287, 8
    %v320 = vpop.permute.xlu0 %319
    %321 = vrot.lane.b32.xlu0 %v288, 8
    %v322 = vpop.permute.xlu0 %321
    %323 = vrot.lane.b32.xlu0 %v289, 8
    %v324 = vpop.permute.xlu0 %323
    %325 = vrot.lane.b32.xlu0 %v290, 8
    %v326 = vpop.permute.xlu0 %325
    %327 = vrot.lane.b32.xlu0 %v291, 8
    %v328 = vpop.permute.xlu0 %327
    %329 = vrot.lane.b32.xlu0 %v292, 8
    %v330 = vpop.permute.xlu0 %329
    %331 = vrot.lane.b32.xlu0 %v293, 8
    %v332 = vpop.permute.xlu0 %331
    %333 = vrot.lane.b32.xlu0 %v294, 8
    %v334 = vpop.permute.xlu0 %333
    %335 = vrot.lane.b32.xlu0 %v295, 8
    %v336 = vpop.permute.xlu0 %335
    %337 = vrot.lane.b32.xlu0 %v296, 8
    %v338 = vpop.permute.xlu0 %337
    %339 = vrot.lane.b32.xlu0 %v297, 8
    %v340 = vpop.permute.xlu0 %339
    %341 = vrot.lane.b32.xlu0 %v298, 8
    %v342 = vpop.permute.xlu0 %341
    %343 = vrot.lane.b32.xlu0 %v299, 8
    %v344 = vpop.permute.xlu0 %343
    %345 = vrot.lane.b32.xlu0 %v300, 8
    %v346 = vpop.permute.xlu0 %345
    %347 = vrot.lane.b32.xlu0 %v301, 8
    %v348 = vpop.permute.xlu0 %347
    %349 = vrot.lane.b32.xlu0 %v302, 8
    %v350 = vpop.permute.xlu0 %349
    %v367 = vsel %vm113, %v287, %v320
    %v368 = vsel %vm113, %v288, %v322
    %v369 = vsel %vm113, %v289, %v324
    %v370 = vsel %vm113, %v290, %v326
    %v371 = vsel %vm113, %v291, %v328
    %v372 = vsel %vm113, %v292, %v330
    %v373 = vsel %vm113, %v293, %v332
    %v374 = vsel %vm113, %v294, %v334
    %v375 = vsel %vm113, %v295, %v336
    %v376 = vsel %vm113, %v296, %v338
    %v377 = vsel %vm113, %v297, %v340
    %v378 = vsel %vm113, %v298, %v342
    %v379 = vsel %vm113, %v299, %v344
    %v380 = vsel %vm113, %v300, %v346
    %v381 = vsel %vm113, %v301, %v348
    %v382 = vsel %vm113, %v302, %v350
    %v383 = vmul.f32 %v240, %v240
    %v384 = vmul.f32 %v243, %v243
    %v385 = vmul.f32 %v246, %v246
    %v386 = vmul.f32 %v249, %v249
    %v387 = vmul.f32 %v252, %v252
    %v388 = vmul.f32 %v255, %v255
    %v389 = vmul.f32 %v258, %v258
    %v390 = vmul.f32 %v261, %v261
    %v391 = vmul.f32 %v264, %v264
    %v392 = vmul.f32 %v267, %v267
    %v393 = vmul.f32 %v270, %v270
    %v394 = vmul.f32 %v273, %v273
    %v395 = vmul.f32 %v276, %v276
    %v396 = vmul.f32 %v279, %v279
    %v397 = vmul.f32 %v282, %v282
    %v398 = vmul.f32 %v285, %v285
    %vm399 = vcmask 130048
    %v400 = vsel %vm399, %v383, 0.0
    %v401 = vsel %vm399, %v384, 0.0
    %v402 = vadd.f32 %v400, %v401
    %v403 = vrot.slane %v402, 4
    %v404 = vadd.f32 %v402, %v403
    %v405 = vrot.slane %v404, 2
    %v406 = vadd.f32 %v404, %v405
    %v407 = vrot.slane %v406, 1
    %v408 = vadd.f32 %v406, %v407
    %v409 = vsel %vm399, %v385, 0.0
    %v410 = vsel %vm399, %v386, 0.0
    %v411 = vadd.f32 %v409, %v410
    %v412 = vrot.slane %v411, 4
    %v413 = vadd.f32 %v411, %v412
    %v414 = vrot.slane %v413, 2
    %v415 = vadd.f32 %v413, %v414
    %v416 = vrot.slane %v415, 1
    %v417 = vadd.f32 %v415, %v416
    %v418 = vsel %vm399, %v387, 0.0
    %v419 = vsel %vm399, %v388, 0.0
    %v420 = vadd.f32 %v418, %v419
    %v421 = vrot.slane %v420, 4
    %v422 = vadd.f32 %v420, %v421
    %v423 = vrot.slane %v422, 2
    %v424 = vadd.f32 %v422, %v423
    %v425 = vrot.slane %v424, 1
    %v426 = vadd.f32 %v424, %v425
    %v427 = vsel %vm399, %v389, 0.0
    %v428 = vsel %vm399, %v390, 0.0
    %v429 = vadd.f32 %v427, %v428
    %v430 = vrot.slane %v429, 4
    %v431 = vadd.f32 %v429, %v430
    %v432 = vrot.slane %v431, 2
    %v433 = vadd.f32 %v431, %v432
    %v434 = vrot.slane %v433, 1
    %v435 = vadd.f32 %v433, %v434
    %v436 = vsel %vm399, %v391, 0.0
    %v437 = vsel %vm399, %v392, 0.0
    %v438 = vadd.f32 %v436, %v437
    %v439 = vrot.slane %v438, 4
    %v440 = vadd.f32 %v438, %v439
    %v441 = vrot.slane %v440, 2
    %v442 = vadd.f32 %v440, %v441
    %v443 = vrot.slane %v442, 1
    %v444 = vadd.f32 %v442, %v443
    %v445 = vsel %vm399, %v393, 0.0
    %v446 = vsel %vm399, %v394, 0.0
    %v447 = vadd.f32 %v445, %v446
    %v448 = vrot.slane %v447, 4
    %v449 = vadd.f32 %v447, %v448
    %v450 = vrot.slane %v449, 2
    %v451 = vadd.f32 %v449, %v450
    %v452 = vrot.slane %v451, 1
    %v453 = vadd.f32 %v451, %v452
    %v454 = vsel %vm399, %v395, 0.0
    %v455 = vsel %vm399, %v396, 0.0
    %v456 = vadd.f32 %v454, %v455
    %v457 = vrot.slane %v456, 4
    %v458 = vadd.f32 %v456, %v457
    %v459 = vrot.slane %v458, 2
    %v460 = vadd.f32 %v458, %v459
    %v461 = vrot.slane %v460, 1
    %v462 = vadd.f32 %v460, %v461
    %v463 = vsel %vm399, %v397, 0.0
    %v464 = vsel %vm399, %v398, 0.0
    %v465 = vadd.f32 %v463, %v464
    %v466 = vrot.slane %v465, 4
    %v467 = vadd.f32 %v465, %v466
    %v468 = vrot.slane %v467, 2
    %v469 = vadd.f32 %v467, %v468
    %v470 = vrot.slane %v469, 1
    %v471 = vadd.f32 %v469, %v470
    %v472 = vmul.f32 %v287, %v287
    %v473 = vmul.f32 %v288, %v288
    %v474 = vsel %vm113, %v472, 0.0
    %v475 = vsel %vm113, %v473, 0.0
    %v476 = vadd.f32 %v474, %v475
    %v477 = vrot.slane %v476, 4
    %v478 = vadd.f32 %v476, %v477
    %v479 = vrot.slane %v478, 2
    %v480 = vadd.f32 %v478, %v479
    %v481 = vrot.slane %v480, 1
    %v482 = vadd.f32 %v480, %v481
    %v483 = vmul.f32 %v289, %v289
    %v484 = vmul.f32 %v290, %v290
    %v485 = vsel %vm113, %v483, 0.0
    %v486 = vsel %vm113, %v484, 0.0
    %v487 = vadd.f32 %v485, %v486
    %v488 = vrot.slane %v487, 4
    %v489 = vadd.f32 %v487, %v488
    %v490 = vrot.slane %v489, 2
    %v491 = vadd.f32 %v489, %v490
    %v492 = vrot.slane %v491, 1
    %v493 = vadd.f32 %v491, %v492
    %v494 = vmul.f32 %v291, %v291
    %v495 = vmul.f32 %v292, %v292
    %v496 = vsel %vm113, %v494, 0.0
    %v497 = vsel %vm113, %v495, 0.0
    %v498 = vadd.f32 %v496, %v497
    %v499 = vrot.slane %v498, 4
    %v500 = vadd.f32 %v498, %v499
    %v501 = vrot.slane %v500, 2
    %v502 = vadd.f32 %v500, %v501
    %v503 = vrot.slane %v502, 1
    %v504 = vadd.f32 %v502, %v503
    %v505 = vmul.f32 %v293, %v293
    %v506 = vmul.f32 %v294, %v294
    %v507 = vsel %vm113, %v505, 0.0
    %v508 = vsel %vm113, %v506, 0.0
    %v509 = vadd.f32 %v507, %v508
    %v510 = vrot.slane %v509, 4
    %v511 = vadd.f32 %v509, %v510
    %v512 = vrot.slane %v511, 2
    %v513 = vadd.f32 %v511, %v512
    %v514 = vrot.slane %v513, 1
    %v515 = vadd.f32 %v513, %v514
    %v516 = vmul.f32 %v295, %v295
    %v517 = vmul.f32 %v296, %v296
    %v518 = vsel %vm113, %v516, 0.0
    %v519 = vsel %vm113, %v517, 0.0
    %v520 = vadd.f32 %v518, %v519
    %v521 = vrot.slane %v520, 4
    %v522 = vadd.f32 %v520, %v521
    %v523 = vrot.slane %v522, 2
    %v524 = vadd.f32 %v522, %v523
    %v525 = vrot.slane %v524, 1
    %v526 = vadd.f32 %v524, %v525
    %v527 = vmul.f32 %v297, %v297
    %v528 = vmul.f32 %v298, %v298
    %v529 = vsel %vm113, %v527, 0.0
    %v530 = vsel %vm113, %v528, 0.0
    %v531 = vadd.f32 %v529, %v530
    %v532 = vrot.slane %v531, 4
    %v533 = vadd.f32 %v531, %v532
    %v534 = vrot.slane %v533, 2
    %v535 = vadd.f32 %v533, %v534
    %v536 = vrot.slane %v535, 1
    %v537 = vadd.f32 %v535, %v536
    %v538 = vmul.f32 %v299, %v299
    %v539 = vmul.f32 %v300, %v300
    %v540 = vsel %vm113, %v538, 0.0
    %v541 = vsel %vm113, %v539, 0.0
    %v542 = vadd.f32 %v540, %v541
    %v543 = vrot.slane %v542, 4
    %v544 = vadd.f32 %v542, %v543
    %v545 = vrot.slane %v544, 2
    %v546 = vadd.f32 %v544, %v545
    %v547 = vrot.slane %v546, 1
    %v548 = vadd.f32 %v546, %v547
    %v549 = vmul.f32 %v301, %v301
    %v550 = vmul.f32 %v302, %v302
    %v551 = vsel %vm113, %v549, 0.0
    %v552 = vsel %vm113, %v550, 0.0
    %v553 = vadd.f32 %v551, %v552
    %v554 = vrot.slane %v553, 4
    %v555 = vadd.f32 %v553, %v554
    %v556 = vrot.slane %v555, 2
    %v557 = vadd.f32 %v555, %v556
    %v558 = vrot.slane %v557, 1
    %v559 = vadd.f32 %v557, %v558
    %vm560 = vcmask 1040384
    %v561 = vsel %vm560, %v482, %v493
    %vm562 = vcmask 1041408
    %v563 = vsel %vm562, %v561, %v504
    %vm564 = vcmask 1042432
    %v565 = vsel %vm564, %v563, %v515
    %vm566 = vcmask 1043456
    %v567 = vsel %vm566, %v565, %v526
    %vm568 = vcmask 1044480
    %v569 = vsel %vm568, %v567, %v537
    %vm570 = vcmask 1045504
    %v571 = vsel %vm570, %v569, %v548
    %vm572 = vcmask 1046528
    %v573 = vsel %vm572, %v571, %v559
    %575 = vrot.lane.b32.xlu0 %v573, 8
    %v576 = vpop.permute.xlu0 %575
    %v578 = vsel %vm113, %v573, %v576
    %vm579 = vcmp.eq.s32.totalorder %v129, 0
    %v580 = vsel %vm579, 0.0, 1e+30
    %v581 = vmul.f32 %v367, %v240
    %v582 = vmul.f32 %v368, %v243
    %v583 = vmul.f32 %v367, %v246
    %v584 = vmul.f32 %v368, %v249
    %v585 = vmul.f32 %v367, %v252
    %v586 = vmul.f32 %v368, %v255
    %v587 = vmul.f32 %v367, %v258
    %v588 = vmul.f32 %v368, %v261
    %v589 = vmul.f32 %v367, %v264
    %v590 = vmul.f32 %v368, %v267
    %v591 = vmul.f32 %v367, %v270
    %v592 = vmul.f32 %v368, %v273
    %v593 = vmul.f32 %v367, %v276
    %v594 = vmul.f32 %v368, %v279
    %v595 = vmul.f32 %v367, %v282
    %v596 = vmul.f32 %v368, %v285
    %v597 = vsel %vm399, %v581, 0.0
    %v598 = vsel %vm399, %v582, 0.0
    %v599 = vadd.f32 %v597, %v598
    %v600 = vrot.slane %v599, 4
    %v601 = vadd.f32 %v599, %v600
    %v602 = vrot.slane %v601, 2
    %v603 = vadd.f32 %v601, %v602
    %v604 = vrot.slane %v603, 1
    %v605 = vadd.f32 %v603, %v604
    %v606 = vsel %vm399, %v583, 0.0
    %v607 = vsel %vm399, %v584, 0.0
    %v608 = vadd.f32 %v606, %v607
    %v609 = vrot.slane %v608, 4
    %v610 = vadd.f32 %v608, %v609
    %v611 = vrot.slane %v610, 2
    %v612 = vadd.f32 %v610, %v611
    %v613 = vrot.slane %v612, 1
    %v614 = vadd.f32 %v612, %v613
    %v615 = vsel %vm399, %v585, 0.0
    %v616 = vsel %vm399, %v586, 0.0
    %v617 = vadd.f32 %v615, %v616
    %v618 = vrot.slane %v617, 4
    %v619 = vadd.f32 %v617, %v618
    %v620 = vrot.slane %v619, 2
    %v621 = vadd.f32 %v619, %v620
    %v622 = vrot.slane %v621, 1
    %v623 = vadd.f32 %v621, %v622
    %v624 = vsel %vm399, %v587, 0.0
    %v625 = vsel %vm399, %v588, 0.0
    %v626 = vadd.f32 %v624, %v625
    %v627 = vrot.slane %v626, 4
    %v628 = vadd.f32 %v626, %v627
    %v629 = vrot.slane %v628, 2
    %v630 = vadd.f32 %v628, %v629
    %v631 = vrot.slane %v630, 1
    %v632 = vadd.f32 %v630, %v631
    %v633 = vsel %vm399, %v589, 0.0
    %v634 = vsel %vm399, %v590, 0.0
    %v635 = vadd.f32 %v633, %v634
    %v636 = vrot.slane %v635, 4
    %v637 = vadd.f32 %v635, %v636
    %v638 = vrot.slane %v637, 2
    %v639 = vadd.f32 %v637, %v638
    %v640 = vrot.slane %v639, 1
    %v641 = vadd.f32 %v639, %v640
    %v642 = vsel %vm399, %v591, 0.0
    %v643 = vsel %vm399, %v592, 0.0
    %v644 = vadd.f32 %v642, %v643
    %v645 = vrot.slane %v644, 4
    %v646 = vadd.f32 %v644, %v645
    %v647 = vrot.slane %v646, 2
    %v648 = vadd.f32 %v646, %v647
    %v649 = vrot.slane %v648, 1
    %v650 = vadd.f32 %v648, %v649
    %v651 = vsel %vm399, %v593, 0.0
    %v652 = vsel %vm399, %v594, 0.0
    %v653 = vadd.f32 %v651, %v652
    %v654 = vrot.slane %v653, 4
    %v655 = vadd.f32 %v653, %v654
    %v656 = vrot.slane %v655, 2
    %v657 = vadd.f32 %v655, %v656
    %v658 = vrot.slane %v657, 1
    %v659 = vadd.f32 %v657, %v658
    %v660 = vsel %vm399, %v595, 0.0
    %v661 = vsel %vm399, %v596, 0.0
    %v662 = vadd.f32 %v660, %v661
    %v663 = vrot.slane %v662, 4
    %v664 = vadd.f32 %v662, %v663
    %v665 = vrot.slane %v664, 2
    %v666 = vadd.f32 %v664, %v665
    %v667 = vrot.slane %v666, 1
    %v668 = vadd.f32 %v666, %v667
    %v669 = vperm.slane %v578, 0
    %vm678 = vcmask 1041409
    %v679 = vsel %vm678, %v417, %v408
    %vm680 = vcmask 1042434
    %v681 = vsel %vm680, %v426, %v679
    %vm682 = vcmask 1043459
    %v683 = vsel %vm682, %v435, %v681
    %vm684 = vcmask 1044484
    %v685 = vsel %vm684, %v444, %v683
    %vm686 = vcmask 1045509
    %v687 = vsel %vm686, %v453, %v685
    %vm688 = vcmask 1046534
    %v689 = vsel %vm688, %v462, %v687
    %vm690 = vcmask 1047559
    %v691 = vsel %vm690, %v471, %v689
    %v693 = vadd.f32 %v669, %v691
    %v694 = vmul.f32 %v605, 2.0
    %v695 = vmul.f32 %v614, 2.0
    %v696 = vmul.f32 %v623, 2.0
    %v697 = vmul.f32 %v632, 2.0
    %v698 = vmul.f32 %v641, 2.0
    %v699 = vmul.f32 %v650, 2.0
    %v700 = vmul.f32 %v659, 2.0
    %v701 = vmul.f32 %v668, 2.0
    %v710 = vsel %vm678, %v695, %v694
    %v711 = vsel %vm680, %v696, %v710
    %v712 = vsel %vm682, %v697, %v711
    %v713 = vsel %vm684, %v698, %v712
    %v714 = vsel %vm686, %v699, %v713
    %v715 = vsel %vm688, %v700, %v714
    %v716 = vsel %vm690, %v701, %v715
    %v718 = vsub.f32 %v693, %v716
    %v719 = vmax.f32 %v718, 1e-12
    %v720 = vrsqrt.pop %v719
    %v721 = vmul.f32 %v720, %v719
    %v722 = vmul.f32 %v721, %v720
    %v723 = vmul.f32 0.5, %v722
    %v724 = vsub.f32 1.5, %v723
    %v725 = vmul.f32 %v720, %v724
    %v726 = vmul.f32 %v719, %v725
    %vm727 = vcmp.eq.f32.partialorder %v719, inf
    %v728 = vsel %vm727, %v719, %v726
    %vm729 = vcmp.eq.f32.partialorder %v719, 0.0
    %v730 = vand.u32 %v719, 2147483648
    %v731 = vsel %vm729, %v730, %v728
    %v732 = vmul.f32 %v731, 0.5
    %v733 = vtanh.pop %v732
    %v734 = vrot.slane %v733, 7
    %vm735 = vcmp.ge.s32.totalorder %v129, 1
    %v736 = vsel %vm735, %v734, 0.0
    %v737 = vadd.f32 %v733, %v736
    %v738 = vrot.slane %v737, 6
    %vm739 = vcmp.ge.s32.totalorder %v129, 2
    %v740 = vsel %vm739, %v738, 0.0
    %v741 = vadd.f32 %v737, %v740
    %v742 = vrot.slane %v741, 4
    %vm743 = vcmp.ge.s32.totalorder %v129, 4
    %v744 = vsel %vm743, %v742, 0.0
    %v745 = vadd.f32 %v741, %v744
    %v746 = vsub.f32 %v580, %v745
    %v747 = vadd.f32 %v746, %v733
    %v748 = vrot.slane %v747, 7
    %v749 = vsel %vm735, %v748, 1e+30
    %v750 = vmin.f32 %v747, %v749
    %v751 = vrot.slane %v750, 6
    %v752 = vsel %vm739, %v751, 1e+30
    %v753 = vmin.f32 %v750, %v752
    %v754 = vrot.slane %v753, 4
    %v755 = vsel %vm743, %v754, 1e+30
    %v756 = vmin.f32 %v753, %v755
    %v757 = vadd.f32 %v745, %v756
    %v758 = vmul.f32 %v369, %v240
    %v759 = vmul.f32 %v370, %v243
    %v760 = vmul.f32 %v369, %v246
    %v761 = vmul.f32 %v370, %v249
    %v762 = vmul.f32 %v369, %v252
    %v763 = vmul.f32 %v370, %v255
    %v764 = vmul.f32 %v369, %v258
    %v765 = vmul.f32 %v370, %v261
    %v766 = vmul.f32 %v369, %v264
    %v767 = vmul.f32 %v370, %v267
    %v768 = vmul.f32 %v369, %v270
    %v769 = vmul.f32 %v370, %v273
    %v770 = vmul.f32 %v369, %v276
    %v771 = vmul.f32 %v370, %v279
    %v772 = vmul.f32 %v369, %v282
    %v773 = vmul.f32 %v370, %v285
    %v774 = vsel %vm399, %v758, 0.0
    %v775 = vsel %vm399, %v759, 0.0
    %v776 = vadd.f32 %v774, %v775
    %v777 = vrot.slane %v776, 4
    %v778 = vadd.f32 %v776, %v777
    %v779 = vrot.slane %v778, 2
    %v780 = vadd.f32 %v778, %v779
    %v781 = vrot.slane %v780, 1
    %v782 = vadd.f32 %v780, %v781
    %v783 = vsel %vm399, %v760, 0.0
    %v784 = vsel %vm399, %v761, 0.0
    %v785 = vadd.f32 %v783, %v784
    %v786 = vrot.slane %v785, 4
    %v787 = vadd.f32 %v785, %v786
    %v788 = vrot.slane %v787, 2
    %v789 = vadd.f32 %v787, %v788
    %v790 = vrot.slane %v789, 1
    %v791 = vadd.f32 %v789, %v790
    %v792 = vsel %vm399, %v762, 0.0
    %v793 = vsel %vm399, %v763, 0.0
    %v794 = vadd.f32 %v792, %v793
    %v795 = vrot.slane %v794, 4
    %v796 = vadd.f32 %v794, %v795
    %v797 = vrot.slane %v796, 2
    %v798 = vadd.f32 %v796, %v797
    %v799 = vrot.slane %v798, 1
    %v800 = vadd.f32 %v798, %v799
    %v801 = vsel %vm399, %v764, 0.0
    %v802 = vsel %vm399, %v765, 0.0
    %v803 = vadd.f32 %v801, %v802
    %v804 = vrot.slane %v803, 4
    %v805 = vadd.f32 %v803, %v804
    %v806 = vrot.slane %v805, 2
    %v807 = vadd.f32 %v805, %v806
    %v808 = vrot.slane %v807, 1
    %v809 = vadd.f32 %v807, %v808
    %v810 = vsel %vm399, %v766, 0.0
    %v811 = vsel %vm399, %v767, 0.0
    %v812 = vadd.f32 %v810, %v811
    %v813 = vrot.slane %v812, 4
    %v814 = vadd.f32 %v812, %v813
    %v815 = vrot.slane %v814, 2
    %v816 = vadd.f32 %v814, %v815
    %v817 = vrot.slane %v816, 1
    %v818 = vadd.f32 %v816, %v817
    %v819 = vsel %vm399, %v768, 0.0
    %v820 = vsel %vm399, %v769, 0.0
    %v821 = vadd.f32 %v819, %v820
    %v822 = vrot.slane %v821, 4
    %v823 = vadd.f32 %v821, %v822
    %v824 = vrot.slane %v823, 2
    %v825 = vadd.f32 %v823, %v824
    %v826 = vrot.slane %v825, 1
    %v827 = vadd.f32 %v825, %v826
    %v828 = vsel %vm399, %v770, 0.0
    %v829 = vsel %vm399, %v771, 0.0
    %v830 = vadd.f32 %v828, %v829
    %v831 = vrot.slane %v830, 4
    %v832 = vadd.f32 %v830, %v831
    %v833 = vrot.slane %v832, 2
    %v834 = vadd.f32 %v832, %v833
    %v835 = vrot.slane %v834, 1
    %v836 = vadd.f32 %v834, %v835
    %v837 = vsel %vm399, %v772, 0.0
    %v838 = vsel %vm399, %v773, 0.0
    %v839 = vadd.f32 %v837, %v838
    %v840 = vrot.slane %v839, 4
    %v841 = vadd.f32 %v839, %v840
    %v842 = vrot.slane %v841, 2
    %v843 = vadd.f32 %v841, %v842
    %v844 = vrot.slane %v843, 1
    %v845 = vadd.f32 %v843, %v844
    %v846 = vperm.slane %v578, 1
    %v847 = vadd.f32 %v846, %v691
    %v848 = vmul.f32 %v782, 2.0
    %v849 = vmul.f32 %v791, 2.0
    %v850 = vmul.f32 %v800, 2.0
    %v851 = vmul.f32 %v809, 2.0
    %v852 = vmul.f32 %v818, 2.0
    %v853 = vmul.f32 %v827, 2.0
    %v854 = vmul.f32 %v836, 2.0
    %v855 = vmul.f32 %v845, 2.0
    %v864 = vsel %vm678, %v849, %v848
    %v865 = vsel %vm680, %v850, %v864
    %v866 = vsel %vm682, %v851, %v865
    %v867 = vsel %vm684, %v852, %v866
    %v868 = vsel %vm686, %v853, %v867
    %v869 = vsel %vm688, %v854, %v868
    %v870 = vsel %vm690, %v855, %v869
    %v872 = vsub.f32 %v847, %v870
    %v873 = vmax.f32 %v872, 1e-12
    %v874 = vrsqrt.pop %v873
    %v875 = vmul.f32 %v874, %v873
    %v876 = vmul.f32 %v875, %v874
    %v877 = vmul.f32 0.5, %v876
    %v878 = vsub.f32 1.5, %v877
    %v879 = vmul.f32 %v874, %v878
    %v880 = vmul.f32 %v873, %v879
    %vm881 = vcmp.eq.f32.partialorder %v873, inf
    %v882 = vsel %vm881, %v873, %v880
    %vm883 = vcmp.eq.f32.partialorder %v873, 0.0
    %v884 = vand.u32 %v873, 2147483648
    %v885 = vsel %vm883, %v884, %v882
    %v886 = vmul.f32 %v885, 0.5
    %v887 = vtanh.pop %v886
    %v888 = vrot.slane %v887, 7
    %v889 = vsel %vm735, %v888, 0.0
    %v890 = vadd.f32 %v887, %v889
    %v891 = vrot.slane %v890, 6
    %v892 = vsel %vm739, %v891, 0.0
    %v893 = vadd.f32 %v890, %v892
    %v894 = vrot.slane %v893, 4
    %v895 = vsel %vm743, %v894, 0.0
    %v896 = vadd.f32 %v893, %v895
    %v897 = vsub.f32 %v757, %v896
    %v898 = vadd.f32 %v897, %v887
    %v899 = vrot.slane %v898, 7
    %v900 = vsel %vm735, %v899, 1e+30
    %v901 = vmin.f32 %v898, %v900
    %v902 = vrot.slane %v901, 6
    %v903 = vsel %vm739, %v902, 1e+30
    %v904 = vmin.f32 %v901, %v903
    %v905 = vrot.slane %v904, 4
    %v906 = vsel %vm743, %v905, 1e+30
    %v907 = vmin.f32 %v904, %v906
    %v908 = vadd.f32 %v896, %v907
    %v909 = vmul.f32 %v371, %v240
    %v910 = vmul.f32 %v372, %v243
    %v911 = vmul.f32 %v371, %v246
    %v912 = vmul.f32 %v372, %v249
    %v913 = vmul.f32 %v371, %v252
    %v914 = vmul.f32 %v372, %v255
    %v915 = vmul.f32 %v371, %v258
    %v916 = vmul.f32 %v372, %v261
    %v917 = vmul.f32 %v371, %v264
    %v918 = vmul.f32 %v372, %v267
    %v919 = vmul.f32 %v371, %v270
    %v920 = vmul.f32 %v372, %v273
    %v921 = vmul.f32 %v371, %v276
    %v922 = vmul.f32 %v372, %v279
    %v923 = vmul.f32 %v371, %v282
    %v924 = vmul.f32 %v372, %v285
    %v925 = vsel %vm399, %v909, 0.0
    %v926 = vsel %vm399, %v910, 0.0
    %v927 = vadd.f32 %v925, %v926
    %v928 = vrot.slane %v927, 4
    %v929 = vadd.f32 %v927, %v928
    %v930 = vrot.slane %v929, 2
    %v931 = vadd.f32 %v929, %v930
    %v932 = vrot.slane %v931, 1
    %v933 = vadd.f32 %v931, %v932
    %v934 = vsel %vm399, %v911, 0.0
    %v935 = vsel %vm399, %v912, 0.0
    %v936 = vadd.f32 %v934, %v935
    %v937 = vrot.slane %v936, 4
    %v938 = vadd.f32 %v936, %v937
    %v939 = vrot.slane %v938, 2
    %v940 = vadd.f32 %v938, %v939
    %v941 = vrot.slane %v940, 1
    %v942 = vadd.f32 %v940, %v941
    %v943 = vsel %vm399, %v913, 0.0
    %v944 = vsel %vm399, %v914, 0.0
    %v945 = vadd.f32 %v943, %v944
    %v946 = vrot.slane %v945, 4
    %v947 = vadd.f32 %v945, %v946
    %v948 = vrot.slane %v947, 2
    %v949 = vadd.f32 %v947, %v948
    %v950 = vrot.slane %v949, 1
    %v951 = vadd.f32 %v949, %v950
    %v952 = vsel %vm399, %v915, 0.0
    %v953 = vsel %vm399, %v916, 0.0
    %v954 = vadd.f32 %v952, %v953
    %v955 = vrot.slane %v954, 4
    %v956 = vadd.f32 %v954, %v955
    %v957 = vrot.slane %v956, 2
    %v958 = vadd.f32 %v956, %v957
    %v959 = vrot.slane %v958, 1
    %v960 = vadd.f32 %v958, %v959
    %v961 = vsel %vm399, %v917, 0.0
    %v962 = vsel %vm399, %v918, 0.0
    %v963 = vadd.f32 %v961, %v962
    %v964 = vrot.slane %v963, 4
    %v965 = vadd.f32 %v963, %v964
    %v966 = vrot.slane %v965, 2
    %v967 = vadd.f32 %v965, %v966
    %v968 = vrot.slane %v967, 1
    %v969 = vadd.f32 %v967, %v968
    %v970 = vsel %vm399, %v919, 0.0
    %v971 = vsel %vm399, %v920, 0.0
    %v972 = vadd.f32 %v970, %v971
    %v973 = vrot.slane %v972, 4
    %v974 = vadd.f32 %v972, %v973
    %v975 = vrot.slane %v974, 2
    %v976 = vadd.f32 %v974, %v975
    %v977 = vrot.slane %v976, 1
    %v978 = vadd.f32 %v976, %v977
    %v979 = vsel %vm399, %v921, 0.0
    %v980 = vsel %vm399, %v922, 0.0
    %v981 = vadd.f32 %v979, %v980
    %v982 = vrot.slane %v981, 4
    %v983 = vadd.f32 %v981, %v982
    %v984 = vrot.slane %v983, 2
    %v985 = vadd.f32 %v983, %v984
    %v986 = vrot.slane %v985, 1
    %v987 = vadd.f32 %v985, %v986
    %v988 = vsel %vm399, %v923, 0.0
    %v989 = vsel %vm399, %v924, 0.0
    %v990 = vadd.f32 %v988, %v989
    %v991 = vrot.slane %v990, 4
    %v992 = vadd.f32 %v990, %v991
    %v993 = vrot.slane %v992, 2
    %v994 = vadd.f32 %v992, %v993
    %v995 = vrot.slane %v994, 1
    %v996 = vadd.f32 %v994, %v995
    %v997 = vperm.slane %v578, 2
    %v998 = vadd.f32 %v997, %v691
    %v999 = vmul.f32 %v933, 2.0
    %v1000 = vmul.f32 %v942, 2.0
    %v1001 = vmul.f32 %v951, 2.0
    %v1002 = vmul.f32 %v960, 2.0
    %v1003 = vmul.f32 %v969, 2.0
    %v1004 = vmul.f32 %v978, 2.0
    %v1005 = vmul.f32 %v987, 2.0
    %v1006 = vmul.f32 %v996, 2.0
    %v1015 = vsel %vm678, %v1000, %v999
    %v1016 = vsel %vm680, %v1001, %v1015
    %v1017 = vsel %vm682, %v1002, %v1016
    %v1018 = vsel %vm684, %v1003, %v1017
    %v1019 = vsel %vm686, %v1004, %v1018
    %v1020 = vsel %vm688, %v1005, %v1019
    %v1021 = vsel %vm690, %v1006, %v1020
    %v1023 = vsub.f32 %v998, %v1021
    %v1024 = vmax.f32 %v1023, 1e-12
    %v1025 = vrsqrt.pop %v1024
    %v1026 = vmul.f32 %v1025, %v1024
    %v1027 = vmul.f32 %v1026, %v1025
    %v1028 = vmul.f32 0.5, %v1027
    %v1029 = vsub.f32 1.5, %v1028
    %v1030 = vmul.f32 %v1025, %v1029
    %v1031 = vmul.f32 %v1024, %v1030
    %vm1032 = vcmp.eq.f32.partialorder %v1024, inf
    %v1033 = vsel %vm1032, %v1024, %v1031
    %vm1034 = vcmp.eq.f32.partialorder %v1024, 0.0
    %v1035 = vand.u32 %v1024, 2147483648
    %v1036 = vsel %vm1034, %v1035, %v1033
    %v1037 = vmul.f32 %v1036, 0.5
    %v1038 = vtanh.pop %v1037
    %v1039 = vrot.slane %v1038, 7
    %v1040 = vsel %vm735, %v1039, 0.0
    %v1041 = vadd.f32 %v1038, %v1040
    %v1042 = vrot.slane %v1041, 6
    %v1043 = vsel %vm739, %v1042, 0.0
    %v1044 = vadd.f32 %v1041, %v1043
    %v1045 = vrot.slane %v1044, 4
    %v1046 = vsel %vm743, %v1045, 0.0
    %v1047 = vadd.f32 %v1044, %v1046
    %v1048 = vsub.f32 %v908, %v1047
    %v1049 = vadd.f32 %v1048, %v1038
    %v1050 = vrot.slane %v1049, 7
    %v1051 = vsel %vm735, %v1050, 1e+30
    %v1052 = vmin.f32 %v1049, %v1051
    %v1053 = vrot.slane %v1052, 6
    %v1054 = vsel %vm739, %v1053, 1e+30
    %v1055 = vmin.f32 %v1052, %v1054
    %v1056 = vrot.slane %v1055, 4
    %v1057 = vsel %vm743, %v1056, 1e+30
    %v1058 = vmin.f32 %v1055, %v1057
    %v1059 = vadd.f32 %v1047, %v1058
    %v1060 = vmul.f32 %v373, %v240
    %v1061 = vmul.f32 %v374, %v243
    %v1062 = vmul.f32 %v373, %v246
    %v1063 = vmul.f32 %v374, %v249
    %v1064 = vmul.f32 %v373, %v252
    %v1065 = vmul.f32 %v374, %v255
    %v1066 = vmul.f32 %v373, %v258
    %v1067 = vmul.f32 %v374, %v261
    %v1068 = vmul.f32 %v373, %v264
    %v1069 = vmul.f32 %v374, %v267
    %v1070 = vmul.f32 %v373, %v270
    %v1071 = vmul.f32 %v374, %v273
    %v1072 = vmul.f32 %v373, %v276
    %v1073 = vmul.f32 %v374, %v279
    %v1074 = vmul.f32 %v373, %v282
    %v1075 = vmul.f32 %v374, %v285
    %v1076 = vsel %vm399, %v1060, 0.0
    %v1077 = vsel %vm399, %v1061, 0.0
    %v1078 = vadd.f32 %v1076, %v1077
    %v1079 = vrot.slane %v1078, 4
    %v1080 = vadd.f32 %v1078, %v1079
    %v1081 = vrot.slane %v1080, 2
    %v1082 = vadd.f32 %v1080, %v1081
    %v1083 = vrot.slane %v1082, 1
    %v1084 = vadd.f32 %v1082, %v1083
    %v1085 = vsel %vm399, %v1062, 0.0
    %v1086 = vsel %vm399, %v1063, 0.0
    %v1087 = vadd.f32 %v1085, %v1086
    %v1088 = vrot.slane %v1087, 4
    %v1089 = vadd.f32 %v1087, %v1088
    %v1090 = vrot.slane %v1089, 2
    %v1091 = vadd.f32 %v1089, %v1090
    %v1092 = vrot.slane %v1091, 1
    %v1093 = vadd.f32 %v1091, %v1092
    %v1094 = vsel %vm399, %v1064, 0.0
    %v1095 = vsel %vm399, %v1065, 0.0
    %v1096 = vadd.f32 %v1094, %v1095
    %v1097 = vrot.slane %v1096, 4
    %v1098 = vadd.f32 %v1096, %v1097
    %v1099 = vrot.slane %v1098, 2
    %v1100 = vadd.f32 %v1098, %v1099
    %v1101 = vrot.slane %v1100, 1
    %v1102 = vadd.f32 %v1100, %v1101
    %v1103 = vsel %vm399, %v1066, 0.0
    %v1104 = vsel %vm399, %v1067, 0.0
    %v1105 = vadd.f32 %v1103, %v1104
    %v1106 = vrot.slane %v1105, 4
    %v1107 = vadd.f32 %v1105, %v1106
    %v1108 = vrot.slane %v1107, 2
    %v1109 = vadd.f32 %v1107, %v1108
    %v1110 = vrot.slane %v1109, 1
    %v1111 = vadd.f32 %v1109, %v1110
    %v1112 = vsel %vm399, %v1068, 0.0
    %v1113 = vsel %vm399, %v1069, 0.0
    %v1114 = vadd.f32 %v1112, %v1113
    %v1115 = vrot.slane %v1114, 4
    %v1116 = vadd.f32 %v1114, %v1115
    %v1117 = vrot.slane %v1116, 2
    %v1118 = vadd.f32 %v1116, %v1117
    %v1119 = vrot.slane %v1118, 1
    %v1120 = vadd.f32 %v1118, %v1119
    %v1121 = vsel %vm399, %v1070, 0.0
    %v1122 = vsel %vm399, %v1071, 0.0
    %v1123 = vadd.f32 %v1121, %v1122
    %v1124 = vrot.slane %v1123, 4
    %v1125 = vadd.f32 %v1123, %v1124
    %v1126 = vrot.slane %v1125, 2
    %v1127 = vadd.f32 %v1125, %v1126
    %v1128 = vrot.slane %v1127, 1
    %v1129 = vadd.f32 %v1127, %v1128
    %v1130 = vsel %vm399, %v1072, 0.0
    %v1131 = vsel %vm399, %v1073, 0.0
    %v1132 = vadd.f32 %v1130, %v1131
    %v1133 = vrot.slane %v1132, 4
    %v1134 = vadd.f32 %v1132, %v1133
    %v1135 = vrot.slane %v1134, 2
    %v1136 = vadd.f32 %v1134, %v1135
    %v1137 = vrot.slane %v1136, 1
    %v1138 = vadd.f32 %v1136, %v1137
    %v1139 = vsel %vm399, %v1074, 0.0
    %v1140 = vsel %vm399, %v1075, 0.0
    %v1141 = vadd.f32 %v1139, %v1140
    %v1142 = vrot.slane %v1141, 4
    %v1143 = vadd.f32 %v1141, %v1142
    %v1144 = vrot.slane %v1143, 2
    %v1145 = vadd.f32 %v1143, %v1144
    %v1146 = vrot.slane %v1145, 1
    %v1147 = vadd.f32 %v1145, %v1146
    %v1148 = vperm.slane %v578, 3
    %v1149 = vadd.f32 %v1148, %v691
    %v1150 = vmul.f32 %v1084, 2.0
    %v1151 = vmul.f32 %v1093, 2.0
    %v1152 = vmul.f32 %v1102, 2.0
    %v1153 = vmul.f32 %v1111, 2.0
    %v1154 = vmul.f32 %v1120, 2.0
    %v1155 = vmul.f32 %v1129, 2.0
    %v1156 = vmul.f32 %v1138, 2.0
    %v1157 = vmul.f32 %v1147, 2.0
    %v1166 = vsel %vm678, %v1151, %v1150
    %v1167 = vsel %vm680, %v1152, %v1166
    %v1168 = vsel %vm682, %v1153, %v1167
    %v1169 = vsel %vm684, %v1154, %v1168
    %v1170 = vsel %vm686, %v1155, %v1169
    %v1171 = vsel %vm688, %v1156, %v1170
    %v1172 = vsel %vm690, %v1157, %v1171
    %v1174 = vsub.f32 %v1149, %v1172
    %v1175 = vmax.f32 %v1174, 1e-12
    %v1176 = vrsqrt.pop %v1175
    %v1177 = vmul.f32 %v1176, %v1175
    %v1178 = vmul.f32 %v1177, %v1176
    %v1179 = vmul.f32 0.5, %v1178
    %v1180 = vsub.f32 1.5, %v1179
    %v1181 = vmul.f32 %v1176, %v1180
    %v1182 = vmul.f32 %v1175, %v1181
    %vm1183 = vcmp.eq.f32.partialorder %v1175, inf
    %v1184 = vsel %vm1183, %v1175, %v1182
    %vm1185 = vcmp.eq.f32.partialorder %v1175, 0.0
    %v1186 = vand.u32 %v1175, 2147483648
    %v1187 = vsel %vm1185, %v1186, %v1184
    %v1188 = vmul.f32 %v1187, 0.5
    %v1189 = vtanh.pop %v1188
    %v1190 = vrot.slane %v1189, 7
    %v1191 = vsel %vm735, %v1190, 0.0
    %v1192 = vadd.f32 %v1189, %v1191
    %v1193 = vrot.slane %v1192, 6
    %v1194 = vsel %vm739, %v1193, 0.0
    %v1195 = vadd.f32 %v1192, %v1194
    %v1196 = vrot.slane %v1195, 4
    %v1197 = vsel %vm743, %v1196, 0.0
    %v1198 = vadd.f32 %v1195, %v1197
    %v1199 = vsub.f32 %v1059, %v1198
    %v1200 = vadd.f32 %v1199, %v1189
    %v1201 = vrot.slane %v1200, 7
    %v1202 = vsel %vm735, %v1201, 1e+30
    %v1203 = vmin.f32 %v1200, %v1202
    %v1204 = vrot.slane %v1203, 6
    %v1205 = vsel %vm739, %v1204, 1e+30
    %v1206 = vmin.f32 %v1203, %v1205
    %v1207 = vrot.slane %v1206, 4
    %v1208 = vsel %vm743, %v1207, 1e+30
    %v1209 = vmin.f32 %v1206, %v1208
    %v1210 = vadd.f32 %v1198, %v1209
    %v1211 = vmul.f32 %v375, %v240
    %v1212 = vmul.f32 %v376, %v243
    %v1213 = vmul.f32 %v375, %v246
    %v1214 = vmul.f32 %v376, %v249
    %v1215 = vmul.f32 %v375, %v252
    %v1216 = vmul.f32 %v376, %v255
    %v1217 = vmul.f32 %v375, %v258
    %v1218 = vmul.f32 %v376, %v261
    %v1219 = vmul.f32 %v375, %v264
    %v1220 = vmul.f32 %v376, %v267
    %v1221 = vmul.f32 %v375, %v270
    %v1222 = vmul.f32 %v376, %v273
    %v1223 = vmul.f32 %v375, %v276
    %v1224 = vmul.f32 %v376, %v279
    %v1225 = vmul.f32 %v375, %v282
    %v1226 = vmul.f32 %v376, %v285
    %v1227 = vsel %vm399, %v1211, 0.0
    %v1228 = vsel %vm399, %v1212, 0.0
    %v1229 = vadd.f32 %v1227, %v1228
    %v1230 = vrot.slane %v1229, 4
    %v1231 = vadd.f32 %v1229, %v1230
    %v1232 = vrot.slane %v1231, 2
    %v1233 = vadd.f32 %v1231, %v1232
    %v1234 = vrot.slane %v1233, 1
    %v1235 = vadd.f32 %v1233, %v1234
    %v1236 = vsel %vm399, %v1213, 0.0
    %v1237 = vsel %vm399, %v1214, 0.0
    %v1238 = vadd.f32 %v1236, %v1237
    %v1239 = vrot.slane %v1238, 4
    %v1240 = vadd.f32 %v1238, %v1239
    %v1241 = vrot.slane %v1240, 2
    %v1242 = vadd.f32 %v1240, %v1241
    %v1243 = vrot.slane %v1242, 1
    %v1244 = vadd.f32 %v1242, %v1243
    %v1245 = vsel %vm399, %v1215, 0.0
    %v1246 = vsel %vm399, %v1216, 0.0
    %v1247 = vadd.f32 %v1245, %v1246
    %v1248 = vrot.slane %v1247, 4
    %v1249 = vadd.f32 %v1247, %v1248
    %v1250 = vrot.slane %v1249, 2
    %v1251 = vadd.f32 %v1249, %v1250
    %v1252 = vrot.slane %v1251, 1
    %v1253 = vadd.f32 %v1251, %v1252
    %v1254 = vsel %vm399, %v1217, 0.0
    %v1255 = vsel %vm399, %v1218, 0.0
    %v1256 = vadd.f32 %v1254, %v1255
    %v1257 = vrot.slane %v1256, 4
    %v1258 = vadd.f32 %v1256, %v1257
    %v1259 = vrot.slane %v1258, 2
    %v1260 = vadd.f32 %v1258, %v1259
    %v1261 = vrot.slane %v1260, 1
    %v1262 = vadd.f32 %v1260, %v1261
    %v1263 = vsel %vm399, %v1219, 0.0
    %v1264 = vsel %vm399, %v1220, 0.0
    %v1265 = vadd.f32 %v1263, %v1264
    %v1266 = vrot.slane %v1265, 4
    %v1267 = vadd.f32 %v1265, %v1266
    %v1268 = vrot.slane %v1267, 2
    %v1269 = vadd.f32 %v1267, %v1268
    %v1270 = vrot.slane %v1269, 1
    %v1271 = vadd.f32 %v1269, %v1270
    %v1272 = vsel %vm399, %v1221, 0.0
    %v1273 = vsel %vm399, %v1222, 0.0
    %v1274 = vadd.f32 %v1272, %v1273
    %v1275 = vrot.slane %v1274, 4
    %v1276 = vadd.f32 %v1274, %v1275
    %v1277 = vrot.slane %v1276, 2
    %v1278 = vadd.f32 %v1276, %v1277
    %v1279 = vrot.slane %v1278, 1
    %v1280 = vadd.f32 %v1278, %v1279
    %v1281 = vsel %vm399, %v1223, 0.0
    %v1282 = vsel %vm399, %v1224, 0.0
    %v1283 = vadd.f32 %v1281, %v1282
    %v1284 = vrot.slane %v1283, 4
    %v1285 = vadd.f32 %v1283, %v1284
    %v1286 = vrot.slane %v1285, 2
    %v1287 = vadd.f32 %v1285, %v1286
    %v1288 = vrot.slane %v1287, 1
    %v1289 = vadd.f32 %v1287, %v1288
    %v1290 = vsel %vm399, %v1225, 0.0
    %v1291 = vsel %vm399, %v1226, 0.0
    %v1292 = vadd.f32 %v1290, %v1291
    %v1293 = vrot.slane %v1292, 4
    %v1294 = vadd.f32 %v1292, %v1293
    %v1295 = vrot.slane %v1294, 2
    %v1296 = vadd.f32 %v1294, %v1295
    %v1297 = vrot.slane %v1296, 1
    %v1298 = vadd.f32 %v1296, %v1297
    %v1299 = vperm.slane %v578, 4
    %v1300 = vadd.f32 %v1299, %v691
    %v1301 = vmul.f32 %v1235, 2.0
    %v1302 = vmul.f32 %v1244, 2.0
    %v1303 = vmul.f32 %v1253, 2.0
    %v1304 = vmul.f32 %v1262, 2.0
    %v1305 = vmul.f32 %v1271, 2.0
    %v1306 = vmul.f32 %v1280, 2.0
    %v1307 = vmul.f32 %v1289, 2.0
    %v1308 = vmul.f32 %v1298, 2.0
    %v1317 = vsel %vm678, %v1302, %v1301
    %v1318 = vsel %vm680, %v1303, %v1317
    %v1319 = vsel %vm682, %v1304, %v1318
    %v1320 = vsel %vm684, %v1305, %v1319
    %v1321 = vsel %vm686, %v1306, %v1320
    %v1322 = vsel %vm688, %v1307, %v1321
    %v1323 = vsel %vm690, %v1308, %v1322
    %v1325 = vsub.f32 %v1300, %v1323
    %v1326 = vmax.f32 %v1325, 1e-12
    %v1327 = vrsqrt.pop %v1326
    %v1328 = vmul.f32 %v1327, %v1326
    %v1329 = vmul.f32 %v1328, %v1327
    %v1330 = vmul.f32 0.5, %v1329
    %v1331 = vsub.f32 1.5, %v1330
    %v1332 = vmul.f32 %v1327, %v1331
    %v1333 = vmul.f32 %v1326, %v1332
    %vm1334 = vcmp.eq.f32.partialorder %v1326, inf
    %v1335 = vsel %vm1334, %v1326, %v1333
    %vm1336 = vcmp.eq.f32.partialorder %v1326, 0.0
    %v1337 = vand.u32 %v1326, 2147483648
    %v1338 = vsel %vm1336, %v1337, %v1335
    %v1339 = vmul.f32 %v1338, 0.5
    %v1340 = vtanh.pop %v1339
    %v1341 = vrot.slane %v1340, 7
    %v1342 = vsel %vm735, %v1341, 0.0
    %v1343 = vadd.f32 %v1340, %v1342
    %v1344 = vrot.slane %v1343, 6
    %v1345 = vsel %vm739, %v1344, 0.0
    %v1346 = vadd.f32 %v1343, %v1345
    %v1347 = vrot.slane %v1346, 4
    %v1348 = vsel %vm743, %v1347, 0.0
    %v1349 = vadd.f32 %v1346, %v1348
    %v1350 = vsub.f32 %v1210, %v1349
    %v1351 = vadd.f32 %v1350, %v1340
    %v1352 = vrot.slane %v1351, 7
    %v1353 = vsel %vm735, %v1352, 1e+30
    %v1354 = vmin.f32 %v1351, %v1353
    %v1355 = vrot.slane %v1354, 6
    %v1356 = vsel %vm739, %v1355, 1e+30
    %v1357 = vmin.f32 %v1354, %v1356
    %v1358 = vrot.slane %v1357, 4
    %v1359 = vsel %vm743, %v1358, 1e+30
    %v1360 = vmin.f32 %v1357, %v1359
    %v1361 = vadd.f32 %v1349, %v1360
    %v1362 = vmul.f32 %v377, %v240
    %v1363 = vmul.f32 %v378, %v243
    %v1364 = vmul.f32 %v377, %v246
    %v1365 = vmul.f32 %v378, %v249
    %v1366 = vmul.f32 %v377, %v252
    %v1367 = vmul.f32 %v378, %v255
    %v1368 = vmul.f32 %v377, %v258
    %v1369 = vmul.f32 %v378, %v261
    %v1370 = vmul.f32 %v377, %v264
    %v1371 = vmul.f32 %v378, %v267
    %v1372 = vmul.f32 %v377, %v270
    %v1373 = vmul.f32 %v378, %v273
    %v1374 = vmul.f32 %v377, %v276
    %v1375 = vmul.f32 %v378, %v279
    %v1376 = vmul.f32 %v377, %v282
    %v1377 = vmul.f32 %v378, %v285
    %v1378 = vsel %vm399, %v1362, 0.0
    %v1379 = vsel %vm399, %v1363, 0.0
    %v1380 = vadd.f32 %v1378, %v1379
    %v1381 = vrot.slane %v1380, 4
    %v1382 = vadd.f32 %v1380, %v1381
    %v1383 = vrot.slane %v1382, 2
    %v1384 = vadd.f32 %v1382, %v1383
    %v1385 = vrot.slane %v1384, 1
    %v1386 = vadd.f32 %v1384, %v1385
    %v1387 = vsel %vm399, %v1364, 0.0
    %v1388 = vsel %vm399, %v1365, 0.0
    %v1389 = vadd.f32 %v1387, %v1388
    %v1390 = vrot.slane %v1389, 4
    %v1391 = vadd.f32 %v1389, %v1390
    %v1392 = vrot.slane %v1391, 2
    %v1393 = vadd.f32 %v1391, %v1392
    %v1394 = vrot.slane %v1393, 1
    %v1395 = vadd.f32 %v1393, %v1394
    %v1396 = vsel %vm399, %v1366, 0.0
    %v1397 = vsel %vm399, %v1367, 0.0
    %v1398 = vadd.f32 %v1396, %v1397
    %v1399 = vrot.slane %v1398, 4
    %v1400 = vadd.f32 %v1398, %v1399
    %v1401 = vrot.slane %v1400, 2
    %v1402 = vadd.f32 %v1400, %v1401
    %v1403 = vrot.slane %v1402, 1
    %v1404 = vadd.f32 %v1402, %v1403
    %v1405 = vsel %vm399, %v1368, 0.0
    %v1406 = vsel %vm399, %v1369, 0.0
    %v1407 = vadd.f32 %v1405, %v1406
    %v1408 = vrot.slane %v1407, 4
    %v1409 = vadd.f32 %v1407, %v1408
    %v1410 = vrot.slane %v1409, 2
    %v1411 = vadd.f32 %v1409, %v1410
    %v1412 = vrot.slane %v1411, 1
    %v1413 = vadd.f32 %v1411, %v1412
    %v1414 = vsel %vm399, %v1370, 0.0
    %v1415 = vsel %vm399, %v1371, 0.0
    %v1416 = vadd.f32 %v1414, %v1415
    %v1417 = vrot.slane %v1416, 4
    %v1418 = vadd.f32 %v1416, %v1417
    %v1419 = vrot.slane %v1418, 2
    %v1420 = vadd.f32 %v1418, %v1419
    %v1421 = vrot.slane %v1420, 1
    %v1422 = vadd.f32 %v1420, %v1421
    %v1423 = vsel %vm399, %v1372, 0.0
    %v1424 = vsel %vm399, %v1373, 0.0
    %v1425 = vadd.f32 %v1423, %v1424
    %v1426 = vrot.slane %v1425, 4
    %v1427 = vadd.f32 %v1425, %v1426
    %v1428 = vrot.slane %v1427, 2
    %v1429 = vadd.f32 %v1427, %v1428
    %v1430 = vrot.slane %v1429, 1
    %v1431 = vadd.f32 %v1429, %v1430
    %v1432 = vsel %vm399, %v1374, 0.0
    %v1433 = vsel %vm399, %v1375, 0.0
    %v1434 = vadd.f32 %v1432, %v1433
    %v1435 = vrot.slane %v1434, 4
    %v1436 = vadd.f32 %v1434, %v1435
    %v1437 = vrot.slane %v1436, 2
    %v1438 = vadd.f32 %v1436, %v1437
    %v1439 = vrot.slane %v1438, 1
    %v1440 = vadd.f32 %v1438, %v1439
    %v1441 = vsel %vm399, %v1376, 0.0
    %v1442 = vsel %vm399, %v1377, 0.0
    %v1443 = vadd.f32 %v1441, %v1442
    %v1444 = vrot.slane %v1443, 4
    %v1445 = vadd.f32 %v1443, %v1444
    %v1446 = vrot.slane %v1445, 2
    %v1447 = vadd.f32 %v1445, %v1446
    %v1448 = vrot.slane %v1447, 1
    %v1449 = vadd.f32 %v1447, %v1448
    %v1450 = vperm.slane %v578, 5
    %v1451 = vadd.f32 %v1450, %v691
    %v1452 = vmul.f32 %v1386, 2.0
    %v1453 = vmul.f32 %v1395, 2.0
    %v1454 = vmul.f32 %v1404, 2.0
    %v1455 = vmul.f32 %v1413, 2.0
    %v1456 = vmul.f32 %v1422, 2.0
    %v1457 = vmul.f32 %v1431, 2.0
    %v1458 = vmul.f32 %v1440, 2.0
    %v1459 = vmul.f32 %v1449, 2.0
    %v1468 = vsel %vm678, %v1453, %v1452
    %v1469 = vsel %vm680, %v1454, %v1468
    %v1470 = vsel %vm682, %v1455, %v1469
    %v1471 = vsel %vm684, %v1456, %v1470
    %v1472 = vsel %vm686, %v1457, %v1471
    %v1473 = vsel %vm688, %v1458, %v1472
    %v1474 = vsel %vm690, %v1459, %v1473
    %v1476 = vsub.f32 %v1451, %v1474
    %v1477 = vmax.f32 %v1476, 1e-12
    %v1478 = vrsqrt.pop %v1477
    %v1479 = vmul.f32 %v1478, %v1477
    %v1480 = vmul.f32 %v1479, %v1478
    %v1481 = vmul.f32 0.5, %v1480
    %v1482 = vsub.f32 1.5, %v1481
    %v1483 = vmul.f32 %v1478, %v1482
    %v1484 = vmul.f32 %v1477, %v1483
    %vm1485 = vcmp.eq.f32.partialorder %v1477, inf
    %v1486 = vsel %vm1485, %v1477, %v1484
    %vm1487 = vcmp.eq.f32.partialorder %v1477, 0.0
    %v1488 = vand.u32 %v1477, 2147483648
    %v1489 = vsel %vm1487, %v1488, %v1486
    %v1490 = vmul.f32 %v1489, 0.5
    %v1491 = vtanh.pop %v1490
    %v1492 = vrot.slane %v1491, 7
    %v1493 = vsel %vm735, %v1492, 0.0
    %v1494 = vadd.f32 %v1491, %v1493
    %v1495 = vrot.slane %v1494, 6
    %v1496 = vsel %vm739, %v1495, 0.0
    %v1497 = vadd.f32 %v1494, %v1496
    %v1498 = vrot.slane %v1497, 4
    %v1499 = vsel %vm743, %v1498, 0.0
    %v1500 = vadd.f32 %v1497, %v1499
    %v1501 = vsub.f32 %v1361, %v1500
    %v1502 = vadd.f32 %v1501, %v1491
    %v1503 = vrot.slane %v1502, 7
    %v1504 = vsel %vm735, %v1503, 1e+30
    %v1505 = vmin.f32 %v1502, %v1504
    %v1506 = vrot.slane %v1505, 6
    %v1507 = vsel %vm739, %v1506, 1e+30
    %v1508 = vmin.f32 %v1505, %v1507
    %v1509 = vrot.slane %v1508, 4
    %v1510 = vsel %vm743, %v1509, 1e+30
    %v1511 = vmin.f32 %v1508, %v1510
    %v1512 = vadd.f32 %v1500, %v1511
    %v1513 = vmul.f32 %v379, %v240
    %v1514 = vmul.f32 %v380, %v243
    %v1515 = vmul.f32 %v379, %v246
    %v1516 = vmul.f32 %v380, %v249
    %v1517 = vmul.f32 %v379, %v252
    %v1518 = vmul.f32 %v380, %v255
    %v1519 = vmul.f32 %v379, %v258
    %v1520 = vmul.f32 %v380, %v261
    %v1521 = vmul.f32 %v379, %v264
    %v1522 = vmul.f32 %v380, %v267
    %v1523 = vmul.f32 %v379, %v270
    %v1524 = vmul.f32 %v380, %v273
    %v1525 = vmul.f32 %v379, %v276
    %v1526 = vmul.f32 %v380, %v279
    %v1527 = vmul.f32 %v379, %v282
    %v1528 = vmul.f32 %v380, %v285
    %v1529 = vsel %vm399, %v1513, 0.0
    %v1530 = vsel %vm399, %v1514, 0.0
    %v1531 = vadd.f32 %v1529, %v1530
    %v1532 = vrot.slane %v1531, 4
    %v1533 = vadd.f32 %v1531, %v1532
    %v1534 = vrot.slane %v1533, 2
    %v1535 = vadd.f32 %v1533, %v1534
    %v1536 = vrot.slane %v1535, 1
    %v1537 = vadd.f32 %v1535, %v1536
    %v1538 = vsel %vm399, %v1515, 0.0
    %v1539 = vsel %vm399, %v1516, 0.0
    %v1540 = vadd.f32 %v1538, %v1539
    %v1541 = vrot.slane %v1540, 4
    %v1542 = vadd.f32 %v1540, %v1541
    %v1543 = vrot.slane %v1542, 2
    %v1544 = vadd.f32 %v1542, %v1543
    %v1545 = vrot.slane %v1544, 1
    %v1546 = vadd.f32 %v1544, %v1545
    %v1547 = vsel %vm399, %v1517, 0.0
    %v1548 = vsel %vm399, %v1518, 0.0
    %v1549 = vadd.f32 %v1547, %v1548
    %v1550 = vrot.slane %v1549, 4
    %v1551 = vadd.f32 %v1549, %v1550
    %v1552 = vrot.slane %v1551, 2
    %v1553 = vadd.f32 %v1551, %v1552
    %v1554 = vrot.slane %v1553, 1
    %v1555 = vadd.f32 %v1553, %v1554
    %v1556 = vsel %vm399, %v1519, 0.0
    %v1557 = vsel %vm399, %v1520, 0.0
    %v1558 = vadd.f32 %v1556, %v1557
    %v1559 = vrot.slane %v1558, 4
    %v1560 = vadd.f32 %v1558, %v1559
    %v1561 = vrot.slane %v1560, 2
    %v1562 = vadd.f32 %v1560, %v1561
    %v1563 = vrot.slane %v1562, 1
    %v1564 = vadd.f32 %v1562, %v1563
    %v1565 = vsel %vm399, %v1521, 0.0
    %v1566 = vsel %vm399, %v1522, 0.0
    %v1567 = vadd.f32 %v1565, %v1566
    %v1568 = vrot.slane %v1567, 4
    %v1569 = vadd.f32 %v1567, %v1568
    %v1570 = vrot.slane %v1569, 2
    %v1571 = vadd.f32 %v1569, %v1570
    %v1572 = vrot.slane %v1571, 1
    %v1573 = vadd.f32 %v1571, %v1572
    %v1574 = vsel %vm399, %v1523, 0.0
    %v1575 = vsel %vm399, %v1524, 0.0
    %v1576 = vadd.f32 %v1574, %v1575
    %v1577 = vrot.slane %v1576, 4
    %v1578 = vadd.f32 %v1576, %v1577
    %v1579 = vrot.slane %v1578, 2
    %v1580 = vadd.f32 %v1578, %v1579
    %v1581 = vrot.slane %v1580, 1
    %v1582 = vadd.f32 %v1580, %v1581
    %v1583 = vsel %vm399, %v1525, 0.0
    %v1584 = vsel %vm399, %v1526, 0.0
    %v1585 = vadd.f32 %v1583, %v1584
    %v1586 = vrot.slane %v1585, 4
    %v1587 = vadd.f32 %v1585, %v1586
    %v1588 = vrot.slane %v1587, 2
    %v1589 = vadd.f32 %v1587, %v1588
    %v1590 = vrot.slane %v1589, 1
    %v1591 = vadd.f32 %v1589, %v1590
    %v1592 = vsel %vm399, %v1527, 0.0
    %v1593 = vsel %vm399, %v1528, 0.0
    %v1594 = vadd.f32 %v1592, %v1593
    %v1595 = vrot.slane %v1594, 4
    %v1596 = vadd.f32 %v1594, %v1595
    %v1597 = vrot.slane %v1596, 2
    %v1598 = vadd.f32 %v1596, %v1597
    %v1599 = vrot.slane %v1598, 1
    %v1600 = vadd.f32 %v1598, %v1599
    %v1601 = vperm.slane %v578, 6
    %v1602 = vadd.f32 %v1601, %v691
    %v1603 = vmul.f32 %v1537, 2.0
    %v1604 = vmul.f32 %v1546, 2.0
    %v1605 = vmul.f32 %v1555, 2.0
    %v1606 = vmul.f32 %v1564, 2.0
    %v1607 = vmul.f32 %v1573, 2.0
    %v1608 = vmul.f32 %v1582, 2.0
    %v1609 = vmul.f32 %v1591, 2.0
    %v1610 = vmul.f32 %v1600, 2.0
    %v1619 = vsel %vm678, %v1604, %v1603
    %v1620 = vsel %vm680, %v1605, %v1619
    %v1621 = vsel %vm682, %v1606, %v1620
    %v1622 = vsel %vm684, %v1607, %v1621
    %v1623 = vsel %vm686, %v1608, %v1622
    %v1624 = vsel %vm688, %v1609, %v1623
    %v1625 = vsel %vm690, %v1610, %v1624
    %v1627 = vsub.f32 %v1602, %v1625
    %v1628 = vmax.f32 %v1627, 1e-12
    %v1629 = vrsqrt.pop %v1628
    %v1630 = vmul.f32 %v1629, %v1628
    %v1631 = vmul.f32 %v1630, %v1629
    %v1632 = vmul.f32 0.5, %v1631
    %v1633 = vsub.f32 1.5, %v1632
    %v1634 = vmul.f32 %v1629, %v1633
    %v1635 = vmul.f32 %v1628, %v1634
    %vm1636 = vcmp.eq.f32.partialorder %v1628, inf
    %v1637 = vsel %vm1636, %v1628, %v1635
    %vm1638 = vcmp.eq.f32.partialorder %v1628, 0.0
    %v1639 = vand.u32 %v1628, 2147483648
    %v1640 = vsel %vm1638, %v1639, %v1637
    %v1641 = vmul.f32 %v1640, 0.5
    %v1642 = vtanh.pop %v1641
    %v1643 = vrot.slane %v1642, 7
    %v1644 = vsel %vm735, %v1643, 0.0
    %v1645 = vadd.f32 %v1642, %v1644
    %v1646 = vrot.slane %v1645, 6
    %v1647 = vsel %vm739, %v1646, 0.0
    %v1648 = vadd.f32 %v1645, %v1647
    %v1649 = vrot.slane %v1648, 4
    %v1650 = vsel %vm743, %v1649, 0.0
    %v1651 = vadd.f32 %v1648, %v1650
    %v1652 = vsub.f32 %v1512, %v1651
    %v1653 = vadd.f32 %v1652, %v1642
    %v1654 = vrot.slane %v1653, 7
    %v1655 = vsel %vm735, %v1654, 1e+30
    %v1656 = vmin.f32 %v1653, %v1655
    %v1657 = vrot.slane %v1656, 6
    %v1658 = vsel %vm739, %v1657, 1e+30
    %v1659 = vmin.f32 %v1656, %v1658
    %v1660 = vrot.slane %v1659, 4
    %v1661 = vsel %vm743, %v1660, 1e+30
    %v1662 = vmin.f32 %v1659, %v1661
    %v1663 = vadd.f32 %v1651, %v1662
    %v1664 = vmul.f32 %v381, %v240
    %v1665 = vmul.f32 %v382, %v243
    %v1666 = vmul.f32 %v381, %v246
    %v1667 = vmul.f32 %v382, %v249
    %v1668 = vmul.f32 %v381, %v252
    %v1669 = vmul.f32 %v382, %v255
    %v1670 = vmul.f32 %v381, %v258
    %v1671 = vmul.f32 %v382, %v261
    %v1672 = vmul.f32 %v381, %v264
    %v1673 = vmul.f32 %v382, %v267
    %v1674 = vmul.f32 %v381, %v270
    %v1675 = vmul.f32 %v382, %v273
    %v1676 = vmul.f32 %v381, %v276
    %v1677 = vmul.f32 %v382, %v279
    %v1678 = vmul.f32 %v381, %v282
    %v1679 = vmul.f32 %v382, %v285
    %v1680 = vsel %vm399, %v1664, 0.0
    %v1681 = vsel %vm399, %v1665, 0.0
    %v1682 = vadd.f32 %v1680, %v1681
    %v1683 = vrot.slane %v1682, 4
    %v1684 = vadd.f32 %v1682, %v1683
    %v1685 = vrot.slane %v1684, 2
    %v1686 = vadd.f32 %v1684, %v1685
    %v1687 = vrot.slane %v1686, 1
    %v1688 = vadd.f32 %v1686, %v1687
    %v1689 = vsel %vm399, %v1666, 0.0
    %v1690 = vsel %vm399, %v1667, 0.0
    %v1691 = vadd.f32 %v1689, %v1690
    %v1692 = vrot.slane %v1691, 4
    %v1693 = vadd.f32 %v1691, %v1692
    %v1694 = vrot.slane %v1693, 2
    %v1695 = vadd.f32 %v1693, %v1694
    %v1696 = vrot.slane %v1695, 1
    %v1697 = vadd.f32 %v1695, %v1696
    %v1698 = vsel %vm399, %v1668, 0.0
    %v1699 = vsel %vm399, %v1669, 0.0
    %v1700 = vadd.f32 %v1698, %v1699
    %v1701 = vrot.slane %v1700, 4
    %v1702 = vadd.f32 %v1700, %v1701
    %v1703 = vrot.slane %v1702, 2
    %v1704 = vadd.f32 %v1702, %v1703
    %v1705 = vrot.slane %v1704, 1
    %v1706 = vadd.f32 %v1704, %v1705
    %v1707 = vsel %vm399, %v1670, 0.0
    %v1708 = vsel %vm399, %v1671, 0.0
    %v1709 = vadd.f32 %v1707, %v1708
    %v1710 = vrot.slane %v1709, 4
    %v1711 = vadd.f32 %v1709, %v1710
    %v1712 = vrot.slane %v1711, 2
    %v1713 = vadd.f32 %v1711, %v1712
    %v1714 = vrot.slane %v1713, 1
    %v1715 = vadd.f32 %v1713, %v1714
    %v1716 = vsel %vm399, %v1672, 0.0
    %v1717 = vsel %vm399, %v1673, 0.0
    %v1718 = vadd.f32 %v1716, %v1717
    %v1719 = vrot.slane %v1718, 4
    %v1720 = vadd.f32 %v1718, %v1719
    %v1721 = vrot.slane %v1720, 2
    %v1722 = vadd.f32 %v1720, %v1721
    %v1723 = vrot.slane %v1722, 1
    %v1724 = vadd.f32 %v1722, %v1723
    %v1725 = vsel %vm399, %v1674, 0.0
    %v1726 = vsel %vm399, %v1675, 0.0
    %v1727 = vadd.f32 %v1725, %v1726
    %v1728 = vrot.slane %v1727, 4
    %v1729 = vadd.f32 %v1727, %v1728
    %v1730 = vrot.slane %v1729, 2
    %v1731 = vadd.f32 %v1729, %v1730
    %v1732 = vrot.slane %v1731, 1
    %v1733 = vadd.f32 %v1731, %v1732
    %v1734 = vsel %vm399, %v1676, 0.0
    %v1735 = vsel %vm399, %v1677, 0.0
    %v1736 = vadd.f32 %v1734, %v1735
    %v1737 = vrot.slane %v1736, 4
    %v1738 = vadd.f32 %v1736, %v1737
    %v1739 = vrot.slane %v1738, 2
    %v1740 = vadd.f32 %v1738, %v1739
    %v1741 = vrot.slane %v1740, 1
    %v1742 = vadd.f32 %v1740, %v1741
    %v1743 = vsel %vm399, %v1678, 0.0
    %v1744 = vsel %vm399, %v1679, 0.0
    %v1745 = vadd.f32 %v1743, %v1744
    %v1746 = vrot.slane %v1745, 4
    %v1747 = vadd.f32 %v1745, %v1746
    %v1748 = vrot.slane %v1747, 2
    %v1749 = vadd.f32 %v1747, %v1748
    %v1750 = vrot.slane %v1749, 1
    %v1751 = vadd.f32 %v1749, %v1750
    %v1752 = vperm.slane %v578, 7
    %v1753 = vadd.f32 %v1752, %v691
    %v1754 = vmul.f32 %v1688, 2.0
    %v1755 = vmul.f32 %v1697, 2.0
    %v1756 = vmul.f32 %v1706, 2.0
    %v1757 = vmul.f32 %v1715, 2.0
    %v1758 = vmul.f32 %v1724, 2.0
    %v1759 = vmul.f32 %v1733, 2.0
    %v1760 = vmul.f32 %v1742, 2.0
    %v1761 = vmul.f32 %v1751, 2.0
    %v1770 = vsel %vm678, %v1755, %v1754
    %v1771 = vsel %vm680, %v1756, %v1770
    %v1772 = vsel %vm682, %v1757, %v1771
    %v1773 = vsel %vm684, %v1758, %v1772
    %v1774 = vsel %vm686, %v1759, %v1773
    %v1775 = vsel %vm688, %v1760, %v1774
    %v1776 = vsel %vm690, %v1761, %v1775
    %v1778 = vsub.f32 %v1753, %v1776
    %v1779 = vmax.f32 %v1778, 1e-12
    %v1780 = vrsqrt.pop %v1779
    %v1781 = vmul.f32 %v1780, %v1779
    %v1782 = vmul.f32 %v1781, %v1780
    %v1783 = vmul.f32 0.5, %v1782
    %v1784 = vsub.f32 1.5, %v1783
    %v1785 = vmul.f32 %v1780, %v1784
    %v1786 = vmul.f32 %v1779, %v1785
    %vm1787 = vcmp.eq.f32.partialorder %v1779, inf
    %v1788 = vsel %vm1787, %v1779, %v1786
    %vm1789 = vcmp.eq.f32.partialorder %v1779, 0.0
    %v1790 = vand.u32 %v1779, 2147483648
    %v1791 = vsel %vm1789, %v1790, %v1788
    %v1792 = vmul.f32 %v1791, 0.5
    %v1793 = vtanh.pop %v1792
    %v1794 = vrot.slane %v1793, 7
    %v1795 = vsel %vm735, %v1794, 0.0
    %v1796 = vadd.f32 %v1793, %v1795
    %v1797 = vrot.slane %v1796, 6
    %v1798 = vsel %vm739, %v1797, 0.0
    %v1799 = vadd.f32 %v1796, %v1798
    %v1800 = vrot.slane %v1799, 4
    %v1801 = vsel %vm743, %v1800, 0.0
    %v1802 = vadd.f32 %v1799, %v1801
    %v1803 = vsub.f32 %v1663, %v1802
    %v1804 = vadd.f32 %v1803, %v1793
    %v1805 = vrot.slane %v1804, 7
    %v1806 = vsel %vm735, %v1805, 1e+30
    %v1807 = vmin.f32 %v1804, %v1806
    %v1808 = vrot.slane %v1807, 6
    %v1809 = vsel %vm739, %v1808, 1e+30
    %v1810 = vmin.f32 %v1807, %v1809
    %v1811 = vrot.slane %v1810, 4
    %v1812 = vsel %vm743, %v1811, 1e+30
    %v1813 = vmin.f32 %v1810, %v1812
    %v1814 = vadd.f32 %v1802, %v1813
    %v1815 = vsub.f32 %v120, %v127
    %v1816 = vadd.f32 %v1815, 0.3
    %v1817 = vmax.f32 %v1816, 0.0
    %1819 = vrot.lane.b32.xlu0 %v1814, 120
    %v1820 = vpop.permute.xlu0 %1819
    %v1822 = vsub.f32 %v1814, %v1820
    %v1823 = vadd.f32 %v1822, 0.3
    %v1824 = vmax.f32 %v1823, 0.0
    %v1825 = vsel %vm113, %v1817, 0.0
    %1826 = vadd.xlane.f32.xlu0 %v1825
    %v1827 = vpop.xlane.xlu0 %1826
    %vm1828 = vcmask 0
    %1829 = vst.msk [vmem:[#allocation2] sm:$0x1] %vm1828, %v1827
    %vm1830 = vcmask 64519
    %v1831 = vsel %vm1830, %v1824, 0.0
    %1832 = vadd.xlane.f32.xlu0 %v1831
    %v1833 = vpop.xlane.xlu0 %1832
    %vm1834 = vcmask 7175
    %1835 = vst.msk [vmem:[#allocation4 - $0x7] sm:$0x80] %vm1834, %v1833
    // Predicated region
    $region26: #{triplet_aligned_reid_loss.1} parent=1 // pred_check
      _
    $region27: #{triplet_aligned_reid_loss.1} parent=1 // pred_check_branch
      %1837 = sbr.rel (0) target = $region29
    $region28: #{triplet_aligned_reid_loss.1} parent=1 // pred_region
      %1839 = vsyncadd [#allocation3], 0
      %s1841 = sshll.u32 [#allocation2], 4
      %s1842 = int_to_ptr.vmem [resolvable:$true] %s1841
      %s1843 = sshll.u32 %s6, 4
      %s1844 = int_to_ptr.hbm [resolvable:$true] %s1843
      %1846 = dma.vmem_to_hbm [thread:$0]  %s1842, 16, %s1844, [#allocation3]
    $region29: #{triplet_aligned_reid_loss.1} parent=1 // pred_fallthru
      _
    // Predicated region
    $region30: #{triplet_aligned_reid_loss.1} parent=1 // pred_check
      _
    $region31: #{triplet_aligned_reid_loss.1} parent=1 // pred_check_branch
      %1848 = sbr.rel (0) target = $region33
    $region32: #{triplet_aligned_reid_loss.1} parent=1 // pred_region
      %1850 = vsyncadd [#allocation5], 0
      %s1852 = sshll.u32 [#allocation4], 4
      %s1853 = int_to_ptr.vmem [resolvable:$true] %s1852
      %s1854 = sshll.u32 %s7, 4
      %s1855 = int_to_ptr.hbm [resolvable:$true] %s1854
      %1857 = dma.vmem_to_hbm [thread:$0]  %s1853, 16, %s1855, [#allocation5]
    $region33: #{triplet_aligned_reid_loss.1} parent=1 // pred_fallthru
      _
    // Predicated region
    $region34: #{triplet_aligned_reid_loss.1} parent=1 // pred_check
      _
    $region35: #{triplet_aligned_reid_loss.1} parent=1 // pred_check_branch
      %1859 = sbr.rel (0) target = $region37
    $region36: #{triplet_aligned_reid_loss.1} parent=1 // pred_region
      %1861 = dma.done [#allocation3], 16
    $region37: #{triplet_aligned_reid_loss.1} parent=1 // pred_fallthru
      _
    // Predicated region
    $region38: #{triplet_aligned_reid_loss.1} parent=1 // pred_check
      _
    $region39: #{triplet_aligned_reid_loss.1} parent=1 // pred_check_branch
      %1863 = sbr.rel (0) target = $region41
    $region40: #{triplet_aligned_reid_loss.1} parent=1 // pred_region
      %1865 = dma.done [#allocation5], 16
    $region41: #{triplet_aligned_reid_loss.1} parent=1 // pred_fallthru
      _
    %1866 = vsyncpa [#allocation3], 1
    %1867 = vsyncpa [#allocation5], 1

</llo_original>
